<compile_context>
chip_gen: v5e
topology: v5e:2x2
jax: 0.10.0
libtpu: 0.0.40
codegen_flags: <defaults>
</compile_context>

<pallas_src>
import functools
import math

import jax
import jax.numpy as jnp
from jax.experimental import pallas as pl
from jax.experimental.pallas import tpu as pltpu

_INV_SQRT2 = 1.0 / math.sqrt(2.0)


def _layernorm_f32(x, gamma, beta, eps):
    # x: (rows, C) f32; gamma/beta: (1, C) f32
    mu = jnp.mean(x, axis=-1, keepdims=True)
    xc = x - mu
    var = jnp.mean(xc * xc, axis=-1, keepdims=True)
    return xc * jax.lax.rsqrt(var + eps) * gamma + beta


# ---------------------------------------------------------------------------
# Kernel 1:  out[b] = x[b] + ls1 * proj( SDPA( qkv( LN1(x[b]) ) ) )
# ---------------------------------------------------------------------------
def _attn_block_kernel(x_ref, g1_ref, be1_ref, ls1_ref,
                       wq_ref, bq_ref, wk_ref, bk_ref, wv_ref, bv_ref,
                       wproj_ref, bproj_ref, o_ref, *, num_heads, eps):
    x = x_ref[0].astype(jnp.float32)                       # (N, C)
    N, C = x.shape
    hd = C // num_heads
    scale = hd ** -0.5                                      # SDPA default scale

    h = _layernorm_f32(x, g1_ref[...], be1_ref[...], eps)

    q = jnp.dot(h, wq_ref[...], preferred_element_type=jnp.float32) + bq_ref[...]
    k = jnp.dot(h, wk_ref[...], preferred_element_type=jnp.float32) + bk_ref[...]
    v = jnp.dot(h, wv_ref[...], preferred_element_type=jnp.float32) + bv_ref[...]

    wproj = wproj_ref[...]
    # Per-head attention; each head's output is projected through its row-slice
    # of w_proj and accumulated (identical to concat(heads) @ w_proj).
    acc = jnp.zeros((N, C), jnp.float32)
    for hidx in range(num_heads):                           # static unroll
        sl = slice(hidx * hd, (hidx + 1) * hd)
        qh = q[:, sl] * scale                               # (N, hd)
        kh = k[:, sl]
        vh = v[:, sl]
        s = jax.lax.dot_general(qh, kh, (((1,), (1,)), ((), ())),
                                preferred_element_type=jnp.float32)   # (N, N)
        s = s - jnp.max(s, axis=-1, keepdims=True)
        p = jnp.exp(s)
        p = p / jnp.sum(p, axis=-1, keepdims=True)
        oh = jnp.dot(p, vh, preferred_element_type=jnp.float32)       # (N, hd)
        acc = acc + jnp.dot(oh, wproj[sl, :],
                            preferred_element_type=jnp.float32)

    y = acc + bproj_ref[...]
    # attention-dropout / proj-dropout p=0.0 and DropPath(0.0) -> identity
    o_ref[0] = (x + ls1_ref[...] * y).astype(o_ref.dtype)


def attn_block_pallas(x, gamma1, beta1, ls1, w_qkv, b_qkv, w_proj, b_proj,
                      *, num_heads, eps):
    B, N, C = x.shape
    row = lambda a: a.reshape(1, -1)
    # split the fused qkv weight in the wrapper (column slices, free outside)
    wq, wk, wv = w_qkv[:, :C], w_qkv[:, C:2 * C], w_qkv[:, 2 * C:]
    bq, bk, bv = b_qkv[:C], b_qkv[C:2 * C], b_qkv[2 * C:]

    const = lambda b: (0, 0)
    return pl.pallas_call(
        functools.partial(_attn_block_kernel, num_heads=num_heads, eps=eps),
        out_shape=jax.ShapeDtypeStruct((B, N, C), x.dtype),
        grid_spec=pltpu.PrefetchScalarGridSpec(
            num_scalar_prefetch=0,
            grid=(B,),
            in_specs=[
                pl.BlockSpec((1, N, C), lambda b: (b, 0, 0)),   # x[b]
                pl.BlockSpec((1, C), const),                    # gamma1
                pl.BlockSpec((1, C), const),                    # beta1
                pl.BlockSpec((1, C), const),                    # ls1
                pl.BlockSpec((C, C), const),                    # wq (resident)
                pl.BlockSpec((1, C), const),                    # bq
                pl.BlockSpec((C, C), const),                    # wk (resident)
                pl.BlockSpec((1, C), const),                    # bk
                pl.BlockSpec((C, C), const),                    # wv (resident)
                pl.BlockSpec((1, C), const),                    # bv
                pl.BlockSpec((C, C), const),                    # w_proj (resident)
                pl.BlockSpec((1, C), const),                    # b_proj
            ],
            out_specs=pl.BlockSpec((1, N, C), lambda b: (b, 0, 0)),
        ),
        compiler_params=pltpu.CompilerParams(
            dimension_semantics=("parallel",),
            vmem_limit_bytes=64 * 1024 * 1024,
        ),
    )(x, row(gamma1), row(beta1), row(ls1),
      wq, row(bq), wk, row(bk), wv, row(bv), w_proj, row(b_proj))


# ---------------------------------------------------------------------------
# Kernel 2:  out = x + ls2 * fc2( GELU( fc1( LN2(x) ) ) )   (row-tiled)
# ---------------------------------------------------------------------------
def _mlp_block_kernel(x_ref, g2_ref, be2_ref, ls2_ref,
                      w1_ref, b1_ref, w2_ref, b2_ref, o_ref, *, eps):
    x = x_ref[...].astype(jnp.float32)                      # (tm, C)
    h = _layernorm_f32(x, g2_ref[...], be2_ref[...], eps)
    # fc1: matmul inputs in the weight dtype (bf16 by default), f32 accumulate,
    # bias added in f32 after the accumulation.
    a = jnp.dot(h.astype(w1_ref.dtype), w1_ref[...],
                preferred_element_type=jnp.float32) + b1_ref[...]
    # exact (erf) GELU in f32 — matches torch.nn.GELU() default
    a = 0.5 * a * (1.0 + jax.lax.erf(a * _INV_SQRT2))
    # dropout(p=0.0) -> identity
    y = jnp.dot(a.astype(w2_ref.dtype), w2_ref[...],
                preferred_element_type=jnp.float32) + b2_ref[...]
    # dropout(p=0.0) + DropPath(0.0) -> identity; layer-scale + residual in f32
    o_ref[...] = (x + ls2_ref[...] * y).astype(o_ref.dtype)


def mlp_block_pallas(x2d, gamma2, beta2, ls2, w1, b1, w2, b2,
                     *, eps, tm=256, use_bf16=True):
    M, C = x2d.shape
    I = w1.shape[1]

    # Large row tiles feed the MXU (review: 128-512). Clamp for tiny M, and pad
    # the token axis so every grid step is a full tile (padded rows are dropped).
    if tm >= M:
        tm_eff, m_pad = M, M
    else:
        tm_eff = max(8, (tm // 8) * 8)
        m_pad = pl.cdiv(M, tm_eff) * tm_eff
    x_in = x2d if m_pad == M else jnp.pad(x2d, ((0, m_pad - M), (0, 0)))

    wdt = jnp.bfloat16 if use_bf16 else x2d.dtype
    w1c, w2c = w1.astype(wdt), w2.astype(wdt)
    row = lambda a: a.reshape(1, -1)
    const = lambda i: (0, 0)

    out = pl.pallas_call(
        functools.partial(_mlp_block_kernel, eps=eps),
        out_shape=jax.ShapeDtypeStruct((m_pad, C), x2d.dtype),
        grid_spec=pltpu.PrefetchScalarGridSpec(
            num_scalar_prefetch=0,
            grid=(m_pad // tm_eff,),
            in_specs=[
                pl.BlockSpec((tm_eff, C), lambda i: (i, 0)),    # x row tile
                pl.BlockSpec((1, C), const),                    # gamma2
                pl.BlockSpec((1, C), const),                    # beta2
                pl.BlockSpec((1, C), const),                    # ls2
                pl.BlockSpec((C, I), const),                    # w1 (resident)
                pl.BlockSpec((1, I), const),                    # b1 (f32)
                pl.BlockSpec((I, C), const),                    # w2 (resident)
                pl.BlockSpec((1, C), const),                    # b2 (f32)
            ],
            out_specs=pl.BlockSpec((tm_eff, C), lambda i: (i, 0)),
        ),
        compiler_params=pltpu.CompilerParams(
            dimension_semantics=("parallel",),
            vmem_limit_bytes=64 * 1024 * 1024,
        ),
    )(x_in, row(gamma2), row(beta2), row(ls2), w1c, row(b1), w2c, row(b2))
    return out[:M]


# ---------------------------------------------------------------------------
# Full EncoderLayer forward (pre-norm residual blocks)
# ---------------------------------------------------------------------------
def encoder_layer_pallas(x, p, *, num_heads, eps, tm=256, use_bf16=True):
    B, N, C = x.shape
    h = attn_block_pallas(x, p["g1"], p["be1"], p["ls1"],
                          p["w_qkv"], p["b_qkv"], p["w_proj"], p["b_proj"],
                          num_heads=num_heads, eps=eps)
    y2d = mlp_block_pallas(h.reshape(B * N, C), p["g2"], p["be2"], p["ls2"],
                           p["w1"], p["b1"], p["w2"], p["b2"],
                           eps=eps, tm=tm, use_bf16=use_bf16)
    return y2d.reshape(B, N, C)


# ---------------------------------------------------------------------------
# Pure-JAX reference (f32) of the PyTorch EncoderLayer forward (eval mode)
# ---------------------------------------------------------------------------
def _ref_encoder_layer(x, p, *, num_heads, eps):
    def ln(v, g, b):
        mu = v.mean(-1, keepdims=True)
        var = ((v - mu) ** 2).mean(-1, keepdims=True)
        return (v - mu) / jnp.sqrt(var + eps) * g + b

    B, N, C = x.shape
    hd = C // num_heads
    h = ln(x, p["g1"], p["be1"])
    qkv = h @ p["w_qkv"] + p["b_qkv"]
    qkv = qkv.reshape(B, N, 3, num_heads, hd).transpose(2, 0, 3, 1, 4)
    q, k, v = qkv[0], qkv[1], qkv[2]                       # (B, nh, N, hd)
    s = jnp.einsum("bhnd,bhmd->bhnm", q, k) / math.sqrt(hd)
    a = jax.nn.softmax(s, axis=-1)
    o = jnp.einsum("bhnm,bhmd->bhnd", a, v)
    o = o.transpose(0, 2, 1, 3).reshape(B, N, C)
    x = x + p["ls1"] * (o @ p["w_proj"] + p["b_proj"])

    z = ln(x, p["g2"], p["be2"])
    m = z @ p["w1"] + p["b1"]
    m = 0.5 * m * (1.0 + jax.lax.erf(m * _INV_SQRT2))
    m = m @ p["w2"] + p["b2"]
    return x + p["ls2"] * m


if __name__ == "__main__":
    # small shapes consistent with the module: (batch, seq, hidden) tokens,
    # hidden -> intermediate -> hidden MLP, multi-head attention over hidden.
    batch, seq, hidden, heads, intermediate = 2, 8, 32, 4, 128
    eps = 1e-6

    key = jax.random.PRNGKey(0)
    ks = jax.random.split(key, 12)

    def xavier(k, fan_in, fan_out):
        bound = math.sqrt(6.0 / (fan_in + fan_out))
        return jax.random.uniform(k, (fan_in, fan_out), jnp.float32,
                                  minval=-bound, maxval=bound)

    x = jax.random.normal(ks[0], (batch, seq, hidden), jnp.float32)

    # The module inits biases to zero and LN to (1, 0); we use small random
    # values here to exercise every term of the fused forward pass.
    params = dict(
        g1=1.0 + 0.1 * jax.random.normal(ks[1], (hidden,), jnp.float32),
        be1=0.1 * jax.random.normal(ks[2], (hidden,), jnp.float32),
        ls1=0.1 * jnp.ones((hidden,), jnp.float32),
        w_qkv=xavier(ks[3], hidden, 3 * hidden),
        b_qkv=0.02 * jax.random.normal(ks[4], (3 * hidden,), jnp.float32),
        w_proj=xavier(ks[5], hidden, hidden),
        b_proj=0.02 * jax.random.normal(ks[6], (hidden,), jnp.float32),
        g2=1.0 + 0.1 * jax.random.normal(ks[7], (hidden,), jnp.float32),
        be2=0.1 * jax.random.normal(ks[8], (hidden,), jnp.float32),
        ls2=0.1 * jnp.ones((hidden,), jnp.float32),
        w1=xavier(ks[9], hidden, intermediate),
        b1=0.02 * jax.random.normal(ks[10], (intermediate,), jnp.float32),
        w2=xavier(ks[11], intermediate, hidden),
        b2=jnp.zeros((hidden,), jnp.float32),
    )

    out = encoder_layer_pallas(x, params, num_heads=heads, eps=eps,
                               tm=256, use_bf16=True)
    jax.block_until_ready(out)

    ref = _ref_encoder_layer(x, params, num_heads=heads, eps=eps)
    # bf16 matmul inputs in the MLP kernel -> small drift vs the pure-f32 ref
    err = float(jnp.max(jnp.abs(out - ref)))
    assert jnp.allclose(out, ref, atol=2e-2, rtol=2e-2), err

    print("KERNEL_OK")
</pallas_src>

<mosaic_0001>
module attributes {stable_mosaic.version = 11 : i64} {
  func.func @_attn_block_kernel(%arg0: i32, %arg1: memref<1x8x32xf32, #tpu.memory_space<vmem>>, %arg2: memref<1x32xf32, #tpu.memory_space<vmem>>, %arg3: memref<1x32xf32, #tpu.memory_space<vmem>>, %arg4: memref<1x32xf32, #tpu.memory_space<vmem>>, %arg5: memref<32x32xf32, #tpu.memory_space<vmem>>, %arg6: memref<1x32xf32, #tpu.memory_space<vmem>>, %arg7: memref<32x32xf32, #tpu.memory_space<vmem>>, %arg8: memref<1x32xf32, #tpu.memory_space<vmem>>, %arg9: memref<32x32xf32, #tpu.memory_space<vmem>>, %arg10: memref<1x32xf32, #tpu.memory_space<vmem>>, %arg11: memref<32x32xf32, #tpu.memory_space<vmem>>, %arg12: memref<1x32xf32, #tpu.memory_space<vmem>>, %arg13: memref<1x8x32xf32, #tpu.memory_space<vmem>>) attributes {dimension_semantics = [#tpu.dimension_semantics<parallel>], iteration_bounds = array<i64: 2>, scalar_prefetch = 0 : i64, scratch_operands = 0 : i64, tpu.core_type = #tpu.core_type<tc>, window_params = [{transform_indices = @transform_0, window_bounds = array<i64: 1, 8, 32>}, {pipeline_mode = #tpu.pipeline_mode<synchronous>, transform_indices = @transform_1, window_bounds = array<i64: 1, 32>}, {pipeline_mode = #tpu.pipeline_mode<synchronous>, transform_indices = @transform_2, window_bounds = array<i64: 1, 32>}, {pipeline_mode = #tpu.pipeline_mode<synchronous>, transform_indices = @transform_3, window_bounds = array<i64: 1, 32>}, {pipeline_mode = #tpu.pipeline_mode<synchronous>, transform_indices = @transform_4, window_bounds = array<i64: 32, 32>}, {pipeline_mode = #tpu.pipeline_mode<synchronous>, transform_indices = @transform_5, window_bounds = array<i64: 1, 32>}, {pipeline_mode = #tpu.pipeline_mode<synchronous>, transform_indices = @transform_6, window_bounds = array<i64: 32, 32>}, {pipeline_mode = #tpu.pipeline_mode<synchronous>, transform_indices = @transform_7, window_bounds = array<i64: 1, 32>}, {pipeline_mode = #tpu.pipeline_mode<synchronous>, transform_indices = @transform_8, window_bounds = array<i64: 32, 32>}, {pipeline_mode = #tpu.pipeline_mode<synchronous>, transform_indices = @transform_9, window_bounds = array<i64: 1, 32>}, {pipeline_mode = #tpu.pipeline_mode<synchronous>, transform_indices = @transform_10, window_bounds = array<i64: 32, 32>}, {pipeline_mode = #tpu.pipeline_mode<synchronous>, transform_indices = @transform_11, window_bounds = array<i64: 1, 32>}, {transform_indices = @transform_12, window_bounds = array<i64: 1, 8, 32>}]} {
    %c0 = arith.constant 0 : index
    %c0_0 = arith.constant 0 : index
    %c0_1 = arith.constant 0 : index
    %0 = vector.load %arg1[%c0, %c0_0, %c0_1] : memref<1x8x32xf32, #tpu.memory_space<vmem>>, vector<1x8x32xf32>
    %1 = vector.shape_cast %0 : vector<1x8x32xf32> to vector<8x32xf32>
    %c0_2 = arith.constant 0 : index
    %c0_3 = arith.constant 0 : index
    %2 = vector.load %arg2[%c0_2, %c0_3] : memref<1x32xf32, #tpu.memory_space<vmem>>, vector<1x32xf32>
    %c0_4 = arith.constant 0 : index
    %c0_5 = arith.constant 0 : index
    %3 = vector.load %arg3[%c0_4, %c0_5] : memref<1x32xf32, #tpu.memory_space<vmem>>, vector<1x32xf32>
    %cst = arith.constant dense<0.000000e+00> : vector<8xf32>
    %4 = vector.multi_reduction <add>, %1, %cst [1] : vector<8x32xf32> to vector<8xf32>
    %5 = vector.shape_cast %4 : vector<8xf32> to vector<8x1xf32>
    %cst_6 = arith.constant 3.200000e+01 : f32
    %6 = vector.broadcast %cst_6 : f32 to vector<8x1xf32>
    %7 = arith.divf %5, %6 : vector<8x1xf32>
    %8 = vector.broadcast %7 : vector<8x1xf32> to vector<8x32xf32>
    %9 = arith.subf %1, %8 : vector<8x32xf32>
    %10 = arith.mulf %9, %9 : vector<8x32xf32>
    %cst_7 = arith.constant dense<0.000000e+00> : vector<8xf32>
    %11 = vector.multi_reduction <add>, %10, %cst_7 [1] : vector<8x32xf32> to vector<8xf32>
    %12 = vector.shape_cast %11 : vector<8xf32> to vector<8x1xf32>
    %cst_8 = arith.constant 3.200000e+01 : f32
    %13 = vector.broadcast %cst_8 : f32 to vector<8x1xf32>
    %14 = arith.divf %12, %13 : vector<8x1xf32>
    %cst_9 = arith.constant 9.99999997E-7 : f32
    %15 = vector.broadcast %cst_9 : f32 to vector<8x1xf32>
    %16 = arith.addf %14, %15 : vector<8x1xf32>
    %17 = math.rsqrt %16 : vector<8x1xf32>
    %18 = vector.broadcast %17 : vector<8x1xf32> to vector<8x32xf32>
    %19 = arith.mulf %9, %18 : vector<8x32xf32>
    %20 = vector.broadcast %2 : vector<1x32xf32> to vector<8x32xf32>
    %21 = arith.mulf %19, %20 : vector<8x32xf32>
    %22 = vector.broadcast %3 : vector<1x32xf32> to vector<8x32xf32>
    %23 = arith.addf %21, %22 : vector<8x32xf32>
    %c0_10 = arith.constant 0 : index
    %c0_11 = arith.constant 0 : index
    %24 = vector.load %arg5[%c0_10, %c0_11] : memref<32x32xf32, #tpu.memory_space<vmem>>, vector<32x32xf32>
    %cst_12 = arith.constant dense<0.000000e+00> : vector<8x32xf32>
    %25 = tpu.matmul %23, %24, %cst_12 {dimension_numbers = #tpu.dot_dimension_numbers<[1], [0], [0], [1], [0, 0, 1, 1], [], []>} : vector<8x32xf32>, vector<32x32xf32>, vector<8x32xf32> -> vector<8x32xf32>
    %c0_13 = arith.constant 0 : index
    %c0_14 = arith.constant 0 : index
    %26 = vector.load %arg6[%c0_13, %c0_14] : memref<1x32xf32, #tpu.memory_space<vmem>>, vector<1x32xf32>
    %27 = vector.broadcast %26 : vector<1x32xf32> to vector<8x32xf32>
    %28 = arith.addf %25, %27 : vector<8x32xf32>
    %c0_15 = arith.constant 0 : index
    %c0_16 = arith.constant 0 : index
    %29 = vector.load %arg7[%c0_15, %c0_16] : memref<32x32xf32, #tpu.memory_space<vmem>>, vector<32x32xf32>
    %cst_17 = arith.constant dense<0.000000e+00> : vector<8x32xf32>
    %30 = tpu.matmul %23, %29, %cst_17 {dimension_numbers = #tpu.dot_dimension_numbers<[1], [0], [0], [1], [0, 0, 1, 1], [], []>} : vector<8x32xf32>, vector<32x32xf32>, vector<8x32xf32> -> vector<8x32xf32>
    %c0_18 = arith.constant 0 : index
    %c0_19 = arith.constant 0 : index
    %31 = vector.load %arg8[%c0_18, %c0_19] : memref<1x32xf32, #tpu.memory_space<vmem>>, vector<1x32xf32>
    %32 = vector.broadcast %31 : vector<1x32xf32> to vector<8x32xf32>
    %33 = arith.addf %30, %32 : vector<8x32xf32>
    %c0_20 = arith.constant 0 : index
    %c0_21 = arith.constant 0 : index
    %34 = vector.load %arg9[%c0_20, %c0_21] : memref<32x32xf32, #tpu.memory_space<vmem>>, vector<32x32xf32>
    %cst_22 = arith.constant dense<0.000000e+00> : vector<8x32xf32>
    %35 = tpu.matmul %23, %34, %cst_22 {dimension_numbers = #tpu.dot_dimension_numbers<[1], [0], [0], [1], [0, 0, 1, 1], [], []>} : vector<8x32xf32>, vector<32x32xf32>, vector<8x32xf32> -> vector<8x32xf32>
    %c0_23 = arith.constant 0 : index
    %c0_24 = arith.constant 0 : index
    %36 = vector.load %arg10[%c0_23, %c0_24] : memref<1x32xf32, #tpu.memory_space<vmem>>, vector<1x32xf32>
    %37 = vector.broadcast %36 : vector<1x32xf32> to vector<8x32xf32>
    %38 = arith.addf %35, %37 : vector<8x32xf32>
    %c0_25 = arith.constant 0 : index
    %c0_26 = arith.constant 0 : index
    %39 = vector.load %arg11[%c0_25, %c0_26] : memref<32x32xf32, #tpu.memory_space<vmem>>, vector<32x32xf32>
    %cst_27 = arith.constant 0.000000e+00 : f32
    %40 = vector.broadcast %cst_27 : f32 to vector<8x32xf32>
    %41 = vector.extract_strided_slice %28 {offsets = [0, 0], sizes = [8, 8], strides = [1, 1]} : vector<8x32xf32> to vector<8x8xf32>
    %cst_28 = arith.constant 0.353553385 : f32
    %42 = vector.broadcast %cst_28 : f32 to vector<8x8xf32>
    %43 = arith.mulf %41, %42 : vector<8x8xf32>
    %44 = vector.extract_strided_slice %33 {offsets = [0, 0], sizes = [8, 8], strides = [1, 1]} : vector<8x32xf32> to vector<8x8xf32>
    %45 = vector.extract_strided_slice %38 {offsets = [0, 0], sizes = [8, 8], strides = [1, 1]} : vector<8x32xf32> to vector<8x8xf32>
    %cst_29 = arith.constant dense<0.000000e+00> : vector<8x8xf32>
    %46 = tpu.matmul %43, %44, %cst_29 {dimension_numbers = #tpu.dot_dimension_numbers<[1], [1], [0], [0], [0, 0, 1, 0], [], []>} : vector<8x8xf32>, vector<8x8xf32>, vector<8x8xf32> -> vector<8x8xf32>
    %cst_30 = arith.constant dense<0xFF800000> : vector<8xf32>
    %47 = vector.multi_reduction <maximumf>, %46, %cst_30 [1] : vector<8x8xf32> to vector<8xf32>
    %48 = vector.shape_cast %47 : vector<8xf32> to vector<8x1xf32>
    %49 = vector.broadcast %48 : vector<8x1xf32> to vector<8x8xf32>
    %50 = arith.subf %46, %49 : vector<8x8xf32>
    %51 = math.exp %50 : vector<8x8xf32>
    %cst_31 = arith.constant dense<0.000000e+00> : vector<8xf32>
    %52 = vector.multi_reduction <add>, %51, %cst_31 [1] : vector<8x8xf32> to vector<8xf32>
    %53 = vector.shape_cast %52 : vector<8xf32> to vector<8x1xf32>
    %54 = vector.broadcast %53 : vector<8x1xf32> to vector<8x8xf32>
    %55 = arith.divf %51, %54 : vector<8x8xf32>
    %cst_32 = arith.constant dense<0.000000e+00> : vector<8x8xf32>
    %56 = tpu.matmul %55, %45, %cst_32 {dimension_numbers = #tpu.dot_dimension_numbers<[1], [0], [0], [1], [0, 0, 1, 1], [], []>} : vector<8x8xf32>, vector<8x8xf32>, vector<8x8xf32> -> vector<8x8xf32>
    %57 = vector.extract_strided_slice %39 {offsets = [0, 0], sizes = [8, 32], strides = [1, 1]} : vector<32x32xf32> to vector<8x32xf32>
    %cst_33 = arith.constant dense<0.000000e+00> : vector<8x32xf32>
    %58 = tpu.matmul %56, %57, %cst_33 {dimension_numbers = #tpu.dot_dimension_numbers<[1], [0], [0], [1], [0, 0, 1, 1], [], []>} : vector<8x8xf32>, vector<8x32xf32>, vector<8x32xf32> -> vector<8x32xf32>
    %59 = arith.addf %40, %58 : vector<8x32xf32>
    %60 = vector.extract_strided_slice %28 {offsets = [0, 8], sizes = [8, 8], strides = [1, 1]} : vector<8x32xf32> to vector<8x8xf32>
    %cst_34 = arith.constant 0.353553385 : f32
    %61 = vector.broadcast %cst_34 : f32 to vector<8x8xf32>
    %62 = arith.mulf %60, %61 : vector<8x8xf32>
    %63 = vector.extract_strided_slice %33 {offsets = [0, 8], sizes = [8, 8], strides = [1, 1]} : vector<8x32xf32> to vector<8x8xf32>
    %64 = vector.extract_strided_slice %38 {offsets = [0, 8], sizes = [8, 8], strides = [1, 1]} : vector<8x32xf32> to vector<8x8xf32>
    %cst_35 = arith.constant dense<0.000000e+00> : vector<8x8xf32>
    %65 = tpu.matmul %62, %63, %cst_35 {dimension_numbers = #tpu.dot_dimension_numbers<[1], [1], [0], [0], [0, 0, 1, 0], [], []>} : vector<8x8xf32>, vector<8x8xf32>, vector<8x8xf32> -> vector<8x8xf32>
    %cst_36 = arith.constant dense<0xFF800000> : vector<8xf32>
    %66 = vector.multi_reduction <maximumf>, %65, %cst_36 [1] : vector<8x8xf32> to vector<8xf32>
    %67 = vector.shape_cast %66 : vector<8xf32> to vector<8x1xf32>
    %68 = vector.broadcast %67 : vector<8x1xf32> to vector<8x8xf32>
    %69 = arith.subf %65, %68 : vector<8x8xf32>
    %70 = math.exp %69 : vector<8x8xf32>
    %cst_37 = arith.constant dense<0.000000e+00> : vector<8xf32>
    %71 = vector.multi_reduction <add>, %70, %cst_37 [1] : vector<8x8xf32> to vector<8xf32>
    %72 = vector.shape_cast %71 : vector<8xf32> to vector<8x1xf32>
    %73 = vector.broadcast %72 : vector<8x1xf32> to vector<8x8xf32>
    %74 = arith.divf %70, %73 : vector<8x8xf32>
    %cst_38 = arith.constant dense<0.000000e+00> : vector<8x8xf32>
    %75 = tpu.matmul %74, %64, %cst_38 {dimension_numbers = #tpu.dot_dimension_numbers<[1], [0], [0], [1], [0, 0, 1, 1], [], []>} : vector<8x8xf32>, vector<8x8xf32>, vector<8x8xf32> -> vector<8x8xf32>
    %76 = vector.extract_strided_slice %39 {offsets = [8, 0], sizes = [8, 32], strides = [1, 1]} : vector<32x32xf32> to vector<8x32xf32>
    %cst_39 = arith.constant dense<0.000000e+00> : vector<8x32xf32>
    %77 = tpu.matmul %75, %76, %cst_39 {dimension_numbers = #tpu.dot_dimension_numbers<[1], [0], [0], [1], [0, 0, 1, 1], [], []>} : vector<8x8xf32>, vector<8x32xf32>, vector<8x32xf32> -> vector<8x32xf32>
    %78 = arith.addf %59, %77 : vector<8x32xf32>
    %79 = vector.extract_strided_slice %28 {offsets = [0, 16], sizes = [8, 8], strides = [1, 1]} : vector<8x32xf32> to vector<8x8xf32>
    %cst_40 = arith.constant 0.353553385 : f32
    %80 = vector.broadcast %cst_40 : f32 to vector<8x8xf32>
    %81 = arith.mulf %79, %80 : vector<8x8xf32>
    %82 = vector.extract_strided_slice %33 {offsets = [0, 16], sizes = [8, 8], strides = [1, 1]} : vector<8x32xf32> to vector<8x8xf32>
    %83 = vector.extract_strided_slice %38 {offsets = [0, 16], sizes = [8, 8], strides = [1, 1]} : vector<8x32xf32> to vector<8x8xf32>
    %cst_41 = arith.constant dense<0.000000e+00> : vector<8x8xf32>
    %84 = tpu.matmul %81, %82, %cst_41 {dimension_numbers = #tpu.dot_dimension_numbers<[1], [1], [0], [0], [0, 0, 1, 0], [], []>} : vector<8x8xf32>, vector<8x8xf32>, vector<8x8xf32> -> vector<8x8xf32>
    %cst_42 = arith.constant dense<0xFF800000> : vector<8xf32>
    %85 = vector.multi_reduction <maximumf>, %84, %cst_42 [1] : vector<8x8xf32> to vector<8xf32>
    %86 = vector.shape_cast %85 : vector<8xf32> to vector<8x1xf32>
    %87 = vector.broadcast %86 : vector<8x1xf32> to vector<8x8xf32>
    %88 = arith.subf %84, %87 : vector<8x8xf32>
    %89 = math.exp %88 : vector<8x8xf32>
    %cst_43 = arith.constant dense<0.000000e+00> : vector<8xf32>
    %90 = vector.multi_reduction <add>, %89, %cst_43 [1] : vector<8x8xf32> to vector<8xf32>
    %91 = vector.shape_cast %90 : vector<8xf32> to vector<8x1xf32>
    %92 = vector.broadcast %91 : vector<8x1xf32> to vector<8x8xf32>
    %93 = arith.divf %89, %92 : vector<8x8xf32>
    %cst_44 = arith.constant dense<0.000000e+00> : vector<8x8xf32>
    %94 = tpu.matmul %93, %83, %cst_44 {dimension_numbers = #tpu.dot_dimension_numbers<[1], [0], [0], [1], [0, 0, 1, 1], [], []>} : vector<8x8xf32>, vector<8x8xf32>, vector<8x8xf32> -> vector<8x8xf32>
    %95 = vector.extract_strided_slice %39 {offsets = [16, 0], sizes = [8, 32], strides = [1, 1]} : vector<32x32xf32> to vector<8x32xf32>
    %cst_45 = arith.constant dense<0.000000e+00> : vector<8x32xf32>
    %96 = tpu.matmul %94, %95, %cst_45 {dimension_numbers = #tpu.dot_dimension_numbers<[1], [0], [0], [1], [0, 0, 1, 1], [], []>} : vector<8x8xf32>, vector<8x32xf32>, vector<8x32xf32> -> vector<8x32xf32>
    %97 = arith.addf %78, %96 : vector<8x32xf32>
    %98 = vector.extract_strided_slice %28 {offsets = [0, 24], sizes = [8, 8], strides = [1, 1]} : vector<8x32xf32> to vector<8x8xf32>
    %cst_46 = arith.constant 0.353553385 : f32
    %99 = vector.broadcast %cst_46 : f32 to vector<8x8xf32>
    %100 = arith.mulf %98, %99 : vector<8x8xf32>
    %101 = vector.extract_strided_slice %33 {offsets = [0, 24], sizes = [8, 8], strides = [1, 1]} : vector<8x32xf32> to vector<8x8xf32>
    %102 = vector.extract_strided_slice %38 {offsets = [0, 24], sizes = [8, 8], strides = [1, 1]} : vector<8x32xf32> to vector<8x8xf32>
    %cst_47 = arith.constant dense<0.000000e+00> : vector<8x8xf32>
    %103 = tpu.matmul %100, %101, %cst_47 {dimension_numbers = #tpu.dot_dimension_numbers<[1], [1], [0], [0], [0, 0, 1, 0], [], []>} : vector<8x8xf32>, vector<8x8xf32>, vector<8x8xf32> -> vector<8x8xf32>
    %cst_48 = arith.constant dense<0xFF800000> : vector<8xf32>
    %104 = vector.multi_reduction <maximumf>, %103, %cst_48 [1] : vector<8x8xf32> to vector<8xf32>
    %105 = vector.shape_cast %104 : vector<8xf32> to vector<8x1xf32>
    %106 = vector.broadcast %105 : vector<8x1xf32> to vector<8x8xf32>
    %107 = arith.subf %103, %106 : vector<8x8xf32>
    %108 = math.exp %107 : vector<8x8xf32>
    %cst_49 = arith.constant dense<0.000000e+00> : vector<8xf32>
    %109 = vector.multi_reduction <add>, %108, %cst_49 [1] : vector<8x8xf32> to vector<8xf32>
    %110 = vector.shape_cast %109 : vector<8xf32> to vector<8x1xf32>
    %111 = vector.broadcast %110 : vector<8x1xf32> to vector<8x8xf32>
    %112 = arith.divf %108, %111 : vector<8x8xf32>
    %cst_50 = arith.constant dense<0.000000e+00> : vector<8x8xf32>
    %113 = tpu.matmul %112, %102, %cst_50 {dimension_numbers = #tpu.dot_dimension_numbers<[1], [0], [0], [1], [0, 0, 1, 1], [], []>} : vector<8x8xf32>, vector<8x8xf32>, vector<8x8xf32> -> vector<8x8xf32>
    %114 = vector.extract_strided_slice %39 {offsets = [24, 0], sizes = [8, 32], strides = [1, 1]} : vector<32x32xf32> to vector<8x32xf32>
    %cst_51 = arith.constant dense<0.000000e+00> : vector<8x32xf32>
    %115 = tpu.matmul %113, %114, %cst_51 {dimension_numbers = #tpu.dot_dimension_numbers<[1], [0], [0], [1], [0, 0, 1, 1], [], []>} : vector<8x8xf32>, vector<8x32xf32>, vector<8x32xf32> -> vector<8x32xf32>
    %116 = arith.addf %97, %115 : vector<8x32xf32>
    %c0_52 = arith.constant 0 : index
    %c0_53 = arith.constant 0 : index
    %117 = vector.load %arg12[%c0_52, %c0_53] : memref<1x32xf32, #tpu.memory_space<vmem>>, vector<1x32xf32>
    %118 = vector.broadcast %117 : vector<1x32xf32> to vector<8x32xf32>
    %119 = arith.addf %116, %118 : vector<8x32xf32>
    %c0_54 = arith.constant 0 : index
    %c0_55 = arith.constant 0 : index
    %120 = vector.load %arg4[%c0_54, %c0_55] : memref<1x32xf32, #tpu.memory_space<vmem>>, vector<1x32xf32>
    %121 = vector.broadcast %120 : vector<1x32xf32> to vector<8x32xf32>
    %122 = arith.mulf %121, %119 : vector<8x32xf32>
    %123 = arith.addf %1, %122 : vector<8x32xf32>
    %c0_56 = arith.constant 0 : index
    %c0_57 = arith.constant 0 : index
    %c0_58 = arith.constant 0 : index
    %124 = vector.load %arg13[%c0_56, %c0_57, %c0_58] : memref<1x8x32xf32, #tpu.memory_space<vmem>>, vector<1x8x32xf32>
    %125 = vector.shape_cast %124 : vector<1x8x32xf32> to vector<8x32xf32>
    %126 = vector.shape_cast %123 : vector<8x32xf32> to vector<1x8x32xf32>
    tpu.vector_store %arg13[%c0_56, %c0_57, %c0_58], %126 {strides = array<i32>} : memref<1x8x32xf32, #tpu.memory_space<vmem>>, vector<1x8x32xf32>,
    return
  }
  func.func @transform_0(%arg0: i32) -> (i32, i32, i32) {
    %c0_i32 = arith.constant 0 : i32
    %c0_i32_0 = arith.constant 0 : i32
    %c0_i32_1 = arith.constant 0 : i32
    return %arg0, %c0_i32, %c0_i32_0 : i32, i32, i32
  }
  func.func @transform_1(%arg0: i32) -> (i32, i32) {
    %c0_i32 = arith.constant 0 : i32
    %c0_i32_0 = arith.constant 0 : i32
    %c0_i32_1 = arith.constant 0 : i32
    return %c0_i32, %c0_i32_0 : i32, i32
  }
  func.func @transform_2(%arg0: i32) -> (i32, i32) {
    %c0_i32 = arith.constant 0 : i32
    %c0_i32_0 = arith.constant 0 : i32
    %c0_i32_1 = arith.constant 0 : i32
    return %c0_i32, %c0_i32_0 : i32, i32
  }
  func.func @transform_3(%arg0: i32) -> (i32, i32) {
    %c0_i32 = arith.constant 0 : i32
    %c0_i32_0 = arith.constant 0 : i32
    %c0_i32_1 = arith.constant 0 : i32
    return %c0_i32, %c0_i32_0 : i32, i32
  }
  func.func @transform_4(%arg0: i32) -> (i32, i32) {
    %c0_i32 = arith.constant 0 : i32
    %c0_i32_0 = arith.constant 0 : i32
    %c0_i32_1 = arith.constant 0 : i32
    return %c0_i32, %c0_i32_0 : i32, i32
  }
  func.func @transform_5(%arg0: i32) -> (i32, i32) {
    %c0_i32 = arith.constant 0 : i32
    %c0_i32_0 = arith.constant 0 : i32
    %c0_i32_1 = arith.constant 0 : i32
    return %c0_i32, %c0_i32_0 : i32, i32
  }
  func.func @transform_6(%arg0: i32) -> (i32, i32) {
    %c0_i32 = arith.constant 0 : i32
    %c0_i32_0 = arith.constant 0 : i32
    %c0_i32_1 = arith.constant 0 : i32
    return %c0_i32, %c0_i32_0 : i32, i32
  }
  func.func @transform_7(%arg0: i32) -> (i32, i32) {
    %c0_i32 = arith.constant 0 : i32
    %c0_i32_0 = arith.constant 0 : i32
    %c0_i32_1 = arith.constant 0 : i32
    return %c0_i32, %c0_i32_0 : i32, i32
  }
  func.func @transform_8(%arg0: i32) -> (i32, i32) {
    %c0_i32 = arith.constant 0 : i32
    %c0_i32_0 = arith.constant 0 : i32
    %c0_i32_1 = arith.constant 0 : i32
    return %c0_i32, %c0_i32_0 : i32, i32
  }
  func.func @transform_9(%arg0: i32) -> (i32, i32) {
    %c0_i32 = arith.constant 0 : i32
    %c0_i32_0 = arith.constant 0 : i32
    %c0_i32_1 = arith.constant 0 : i32
    return %c0_i32, %c0_i32_0 : i32, i32
  }
  func.func @transform_10(%arg0: i32) -> (i32, i32) {
    %c0_i32 = arith.constant 0 : i32
    %c0_i32_0 = arith.constant 0 : i32
    %c0_i32_1 = arith.constant 0 : i32
    return %c0_i32, %c0_i32_0 : i32, i32
  }
  func.func @transform_11(%arg0: i32) -> (i32, i32) {
    %c0_i32 = arith.constant 0 : i32
    %c0_i32_0 = arith.constant 0 : i32
    %c0_i32_1 = arith.constant 0 : i32
    return %c0_i32, %c0_i32_0 : i32, i32
  }
  func.func @transform_12(%arg0: i32) -> (i32, i32, i32) {
    %c0_i32 = arith.constant 0 : i32
    %c0_i32_0 = arith.constant 0 : i32
    %c0_i32_1 = arith.constant 0 : i32
    return %arg0, %c0_i32, %c0_i32_0 : i32, i32, i32
  }
}

</mosaic_0001>

<llo_original>
// kernel: tpu_custom_call.1
$region0: #{tpu_custom_call.1}
  #allocation0 [shape = 'u32[]', space=smem, size = 0x4, offset = 0x4, fixed_abs, tag = 'smem constant byte address 0x4 - core index']
  #allocation1 [shape = 'u32[72,128]{1,0:T(1,128)}', space=vmem, size = 0x9000, scoped, tag = 'internal scratch']
  %s0 = inlined_call_operand.hbm [shape: f32[2,8,32], index: 0, kind: input, shape index: {}]
  %s1 = inlined_call_operand.hbm [shape: f32[1,32], index: 1, kind: input, shape index: {}]
  %s2 = inlined_call_operand.vmem [shape: f32[1,32], index: 2, kind: input, shape index: {}]
  %s3 = inlined_call_operand.vmem [shape: f32[1,32], index: 3, kind: input, shape index: {}]
  %s4 = inlined_call_operand.hbm [shape: f32[32,32], index: 4, kind: input, shape index: {}]
  %s5 = inlined_call_operand.vmem [shape: f32[1,32], index: 5, kind: input, shape index: {}]
  %s6 = inlined_call_operand.hbm [shape: f32[32,32], index: 6, kind: input, shape index: {}]
  %s7 = inlined_call_operand.vmem [shape: f32[1,32], index: 7, kind: input, shape index: {}]
  %s8 = inlined_call_operand.hbm [shape: f32[32,32], index: 8, kind: input, shape index: {}]
  %s9 = inlined_call_operand.vmem [shape: f32[1,32], index: 9, kind: input, shape index: {}]
  %s10 = inlined_call_operand.hbm [shape: f32[32,32], index: 10, kind: input, shape index: {}]
  %s11 = inlined_call_operand.vmem [shape: f32[1,32], index: 11, kind: input, shape index: {}]
  %s12 = inlined_call_operand.hbm [shape: f32[2,8,32], index: 12, kind: output, shape index: {}]
  %s13 = sld [smem:[#allocation0]]
  $region105: #{tpu_custom_call.1} parent=0
    _
  %s15 = ssub.s32 1, %s13
  %s16 = scalar_select 0, %s15, %s13
  $region1: #{tpu_custom_call.1} parent=0
    #allocation2 [shape = 'u8[8192]{0}', space=vmem, size = 0x2000, scoped, tag = 'input window, operand 0']
    #allocation3 [shape = 's32[2]{0}', space=sflag, size = 0x8, scoped, tag = 'scoped memory for tpu_custom_call.1']
    #allocation4 [shape = 's32[2]{0}', space=sflag, size = 0x8, scoped, tag = 'scoped memory for tpu_custom_call.1']
    #allocation5 [shape = 'u8[512]{0}', space=vmem, size = 0x400, scoped, tag = 'input window, operand 1, single buffered']
    #allocation6 [shape = 's32[1]{0}', space=sflag, size = 0x4, scoped, tag = 'scoped memory for tpu_custom_call.1']
    #allocation7 [shape = 'u8[16384]{0}', space=vmem, size = 0x4000, scoped, tag = 'input window, operand 4, single buffered']
    #allocation8 [shape = 'u8[16384]{0}', space=vmem, size = 0x4000, scoped, tag = 'input window, operand 6, single buffered']
    #allocation9 [shape = 's32[1]{0}', space=sflag, size = 0x4, scoped, tag = 'scoped memory for tpu_custom_call.1']
    #allocation10 [shape = 'u8[16384]{0}', space=vmem, size = 0x4000, scoped, tag = 'input window, operand 8, single buffered']
    #allocation11 [shape = 'u8[16384]{0}', space=vmem, size = 0x4000, scoped, tag = 'input window, operand 10, single buffered']
    #allocation12 [shape = 's32[1]{0}', space=sflag, size = 0x4, scoped, tag = 'scoped memory for tpu_custom_call.1']
    #allocation13 [shape = 'u8[8192]{0}', space=vmem, size = 0x2000, scoped, tag = 'output window, operand 0']
    %17 = vsyncpa [#allocation3], 0
    %s18 = scalar_lea.sflag [#allocation3], 1
    %19 = vsyncpa %s18, 0
    %20 = vsyncpa [#allocation6], 0
    %21 = vsyncpa [#allocation9], 0
    %22 = vsyncpa [#allocation12], 0
    %23 = vsyncpa [#allocation4], 0
    %s24 = scalar_lea.sflag [#allocation4], 1
    %25 = vsyncpa %s24, 0
    loop: start=0, step=1, limit=4
    $region2: #{tpu_custom_call.1} parent=1 // loop_pre_header
      _
    $region3: #{tpu_custom_call.1} parent=1 // loop_header
      %s27 = sphi 0, %s31
      %p28 = scmp.ge.s32.totalorder %s27, 4
      %s37 = sphi 0, %s39
      %s40 = sphi 0, %s37
      %s41 = sphi 0, %s40
      %s57 = sphi 0, %s41
      %s61 = sphi 0, %s61
      %s63 = sphi 0, %s61
      %s64 = sphi 0, %s63
      %s78 = sphi 0, %s64
      %s82 = sphi 0, %s82
      %s84 = sphi 0, %s82
      %s85 = sphi 0, %s84
      %s99 = sphi 0, %s85
      %s103 = sphi 0, %s103
      %s105 = sphi 0, %s103
      %s106 = sphi 0, %s105
      %s120 = sphi 0, %s106
      %s124 = sphi 0, %s124
      %s126 = sphi 0, %s124
      %s127 = sphi 0, %s126
      %s141 = sphi 0, %s127
      %s145 = sphi 0, %s145
      %s147 = sphi 0, %s145
      %s148 = sphi 0, %s147
      %s162 = sphi 0, %s148
      %s166 = sphi 0, %s166
      %s168 = sphi 0, %s166
      %s169 = sphi 0, %s168
      %s183 = sphi 0, %s169
      %s187 = sphi 0, %s187
      %s189 = sphi 0, %s187
      %s190 = sphi 0, %s189
      %s204 = sphi 0, %s190
      %s208 = sphi 0, %s208
      %s210 = sphi 0, %s208
      %s211 = sphi 0, %s210
      %s225 = sphi 0, %s211
      %s229 = sphi 0, %s229
      %s231 = sphi 0, %s229
      %s232 = sphi 0, %s231
      %s246 = sphi 0, %s232
      %s250 = sphi 0, %s250
      %s252 = sphi 0, %s250
      %s253 = sphi 0, %s252
      %s267 = sphi 0, %s253
      %s271 = sphi 0, %s271
      %s273 = sphi 0, %s271
      %s274 = sphi 0, %s273
      %s288 = sphi 0, %s274
      %s294 = sphi 0, %s296
      %s297 = sphi 0, %s294
      %s298 = sphi 0, %s297
      %s314 = sphi 0, %s298
    $region4: #{tpu_custom_call.1} parent=1 // loop_header_branch
      %30 = sbr.rel (%p28) target = $region8
    $region5: #{tpu_custom_call.1} parent=1 // loop_body
      %s32 = ssub.s32 %s27, 1
      %s33 = ssub.s32 %s27, 2
      %s34 = sadd.s32 %s27, 1
      %s35 = ssub.s32 %s27, %s34
      %p36 = scmp.eq.s32.totalorder %s35, 0
      %s38 = sadd.s32 %s37, 1
      %s39 = scalar_select %p36, %s37, %s38
      %p42 = pneg %p36
      %p43 = scmp.eq.s32.totalorder %s27, 1
      %p44 = por %p42, %p43
      %p45 = scmp.ne.s32.totalorder %s37, %s40
      %p46 = scmp.eq.s32.totalorder %s27, 0
      %p47 = por %p45, %p46
      %p48 = scmp.ne.s32.totalorder %s37, %s40
      %p49 = scmp.eq.s32.totalorder %s32, 1
      %p50 = por %p48, %p49
      %p51 = scmp.ne.s32.totalorder %s40, %s41
      %p52 = scmp.eq.s32.totalorder %s32, 0
      %p53 = por %p51, %p52
      %p54 = scmp.ne.s32.totalorder %s40, %s41
      %p55 = scmp.eq.s32.totalorder %s33, 1
      %p56 = por %p54, %p55
      %p58 = scmp.ne.s32.totalorder %s41, %s57
      %p59 = scmp.eq.s32.totalorder %s33, 0
      %p60 = por %p58, %p59
      %s62 = sadd.s32 %s61, 1
      %p65 = scmp.eq.s32.totalorder %s27, 1
      %p66 = scmp.ne.s32.totalorder %s61, %s63
      %p67 = scmp.eq.s32.totalorder %s27, 0
      %p68 = por %p66, %p67
      %p69 = scmp.ne.s32.totalorder %s61, %s63
      %p70 = scmp.eq.s32.totalorder %s32, 1
      %p71 = por %p69, %p70
      %p72 = scmp.ne.s32.totalorder %s63, %s64
      %p73 = scmp.eq.s32.totalorder %s32, 0
      %p74 = por %p72, %p73
      %p75 = scmp.ne.s32.totalorder %s63, %s64
      %p76 = scmp.eq.s32.totalorder %s33, 1
      %p77 = por %p75, %p76
      %p79 = scmp.ne.s32.totalorder %s64, %s78
      %p80 = scmp.eq.s32.totalorder %s33, 0
      %p81 = por %p79, %p80
      %s83 = sadd.s32 %s82, 1
      %p86 = scmp.eq.s32.totalorder %s27, 1
      %p87 = scmp.ne.s32.totalorder %s82, %s84
      %p88 = scmp.eq.s32.totalorder %s27, 0
      %p89 = por %p87, %p88
      %p90 = scmp.ne.s32.totalorder %s82, %s84
      %p91 = scmp.eq.s32.totalorder %s32, 1
      %p92 = por %p90, %p91
      %p93 = scmp.ne.s32.totalorder %s84, %s85
      %p94 = scmp.eq.s32.totalorder %s32, 0
      %p95 = por %p93, %p94
      %p96 = scmp.ne.s32.totalorder %s84, %s85
      %p97 = scmp.eq.s32.totalorder %s33, 1
      %p98 = por %p96, %p97
      %p100 = scmp.ne.s32.totalorder %s85, %s99
      %p101 = scmp.eq.s32.totalorder %s33, 0
      %p102 = por %p100, %p101
      %s104 = sadd.s32 %s103, 1
      %p107 = scmp.eq.s32.totalorder %s27, 1
      %p108 = scmp.ne.s32.totalorder %s103, %s105
      %p109 = scmp.eq.s32.totalorder %s27, 0
      %p110 = por %p108, %p109
      %p111 = scmp.ne.s32.totalorder %s103, %s105
      %p112 = scmp.eq.s32.totalorder %s32, 1
      %p113 = por %p111, %p112
      %p114 = scmp.ne.s32.totalorder %s105, %s106
      %p115 = scmp.eq.s32.totalorder %s32, 0
      %p116 = por %p114, %p115
      %p117 = scmp.ne.s32.totalorder %s105, %s106
      %p118 = scmp.eq.s32.totalorder %s33, 1
      %p119 = por %p117, %p118
      %p121 = scmp.ne.s32.totalorder %s106, %s120
      %p122 = scmp.eq.s32.totalorder %s33, 0
      %p123 = por %p121, %p122
      %s125 = sadd.s32 %s124, 1
      %p128 = scmp.eq.s32.totalorder %s27, 1
      %p129 = scmp.ne.s32.totalorder %s124, %s126
      %p130 = scmp.eq.s32.totalorder %s27, 0
      %p131 = por %p129, %p130
      %p132 = scmp.ne.s32.totalorder %s124, %s126
      %p133 = scmp.eq.s32.totalorder %s32, 1
      %p134 = por %p132, %p133
      %p135 = scmp.ne.s32.totalorder %s126, %s127
      %p136 = scmp.eq.s32.totalorder %s32, 0
      %p137 = por %p135, %p136
      %p138 = scmp.ne.s32.totalorder %s126, %s127
      %p139 = scmp.eq.s32.totalorder %s33, 1
      %p140 = por %p138, %p139
      %p142 = scmp.ne.s32.totalorder %s127, %s141
      %p143 = scmp.eq.s32.totalorder %s33, 0
      %p144 = por %p142, %p143
      %s146 = sadd.s32 %s145, 1
      %p149 = scmp.eq.s32.totalorder %s27, 1
      %p150 = scmp.ne.s32.totalorder %s145, %s147
      %p151 = scmp.eq.s32.totalorder %s27, 0
      %p152 = por %p150, %p151
      %p153 = scmp.ne.s32.totalorder %s145, %s147
      %p154 = scmp.eq.s32.totalorder %s32, 1
      %p155 = por %p153, %p154
      %p156 = scmp.ne.s32.totalorder %s147, %s148
      %p157 = scmp.eq.s32.totalorder %s32, 0
      %p158 = por %p156, %p157
      %p159 = scmp.ne.s32.totalorder %s147, %s148
      %p160 = scmp.eq.s32.totalorder %s33, 1
      %p161 = por %p159, %p160
      %p163 = scmp.ne.s32.totalorder %s148, %s162
      %p164 = scmp.eq.s32.totalorder %s33, 0
      %p165 = por %p163, %p164
      %s167 = sadd.s32 %s166, 1
      %p170 = scmp.eq.s32.totalorder %s27, 1
      %p171 = scmp.ne.s32.totalorder %s166, %s168
      %p172 = scmp.eq.s32.totalorder %s27, 0
      %p173 = por %p171, %p172
      %p174 = scmp.ne.s32.totalorder %s166, %s168
      %p175 = scmp.eq.s32.totalorder %s32, 1
      %p176 = por %p174, %p175
      %p177 = scmp.ne.s32.totalorder %s168, %s169
      %p178 = scmp.eq.s32.totalorder %s32, 0
      %p179 = por %p177, %p178
      %p180 = scmp.ne.s32.totalorder %s168, %s169
      %p181 = scmp.eq.s32.totalorder %s33, 1
      %p182 = por %p180, %p181
      %p184 = scmp.ne.s32.totalorder %s169, %s183
      %p185 = scmp.eq.s32.totalorder %s33, 0
      %p186 = por %p184, %p185
      %s188 = sadd.s32 %s187, 1
      %p191 = scmp.eq.s32.totalorder %s27, 1
      %p192 = scmp.ne.s32.totalorder %s187, %s189
      %p193 = scmp.eq.s32.totalorder %s27, 0
      %p194 = por %p192, %p193
      %p195 = scmp.ne.s32.totalorder %s187, %s189
      %p196 = scmp.eq.s32.totalorder %s32, 1
      %p197 = por %p195, %p196
      %p198 = scmp.ne.s32.totalorder %s189, %s190
      %p199 = scmp.eq.s32.totalorder %s32, 0
      %p200 = por %p198, %p199
      %p201 = scmp.ne.s32.totalorder %s189, %s190
      %p202 = scmp.eq.s32.totalorder %s33, 1
      %p203 = por %p201, %p202
      %p205 = scmp.ne.s32.totalorder %s190, %s204
      %p206 = scmp.eq.s32.totalorder %s33, 0
      %p207 = por %p205, %p206
      %s209 = sadd.s32 %s208, 1
      %p212 = scmp.eq.s32.totalorder %s27, 1
      %p213 = scmp.ne.s32.totalorder %s208, %s210
      %p214 = scmp.eq.s32.totalorder %s27, 0
      %p215 = por %p213, %p214
      %p216 = scmp.ne.s32.totalorder %s208, %s210
      %p217 = scmp.eq.s32.totalorder %s32, 1
      %p218 = por %p216, %p217
      %p219 = scmp.ne.s32.totalorder %s210, %s211
      %p220 = scmp.eq.s32.totalorder %s32, 0
      %p221 = por %p219, %p220
      %p222 = scmp.ne.s32.totalorder %s210, %s211
      %p223 = scmp.eq.s32.totalorder %s33, 1
      %p224 = por %p222, %p223
      %p226 = scmp.ne.s32.totalorder %s211, %s225
      %p227 = scmp.eq.s32.totalorder %s33, 0
      %p228 = por %p226, %p227
      %s230 = sadd.s32 %s229, 1
      %p233 = scmp.eq.s32.totalorder %s27, 1
      %p234 = scmp.ne.s32.totalorder %s229, %s231
      %p235 = scmp.eq.s32.totalorder %s27, 0
      %p236 = por %p234, %p235
      %p237 = scmp.ne.s32.totalorder %s229, %s231
      %p238 = scmp.eq.s32.totalorder %s32, 1
      %p239 = por %p237, %p238
      %p240 = scmp.ne.s32.totalorder %s231, %s232
      %p241 = scmp.eq.s32.totalorder %s32, 0
      %p242 = por %p240, %p241
      %p243 = scmp.ne.s32.totalorder %s231, %s232
      %p244 = scmp.eq.s32.totalorder %s33, 1
      %p245 = por %p243, %p244
      %p247 = scmp.ne.s32.totalorder %s232, %s246
      %p248 = scmp.eq.s32.totalorder %s33, 0
      %p249 = por %p247, %p248
      %s251 = sadd.s32 %s250, 1
      %p254 = scmp.eq.s32.totalorder %s27, 1
      %p255 = scmp.ne.s32.totalorder %s250, %s252
      %p256 = scmp.eq.s32.totalorder %s27, 0
      %p257 = por %p255, %p256
      %p258 = scmp.ne.s32.totalorder %s250, %s252
      %p259 = scmp.eq.s32.totalorder %s32, 1
      %p260 = por %p258, %p259
      %p261 = scmp.ne.s32.totalorder %s252, %s253
      %p262 = scmp.eq.s32.totalorder %s32, 0
      %p263 = por %p261, %p262
      %p264 = scmp.ne.s32.totalorder %s252, %s253
      %p265 = scmp.eq.s32.totalorder %s33, 1
      %p266 = por %p264, %p265
      %p268 = scmp.ne.s32.totalorder %s253, %s267
      %p269 = scmp.eq.s32.totalorder %s33, 0
      %p270 = por %p268, %p269
      %s272 = sadd.s32 %s271, 1
      %p275 = scmp.eq.s32.totalorder %s27, 1
      %p276 = scmp.ne.s32.totalorder %s271, %s273
      %p277 = scmp.eq.s32.totalorder %s27, 0
      %p278 = por %p276, %p277
      %p279 = scmp.ne.s32.totalorder %s271, %s273
      %p280 = scmp.eq.s32.totalorder %s32, 1
      %p281 = por %p279, %p280
      %p282 = scmp.ne.s32.totalorder %s273, %s274
      %p283 = scmp.eq.s32.totalorder %s32, 0
      %p284 = por %p282, %p283
      %p285 = scmp.ne.s32.totalorder %s273, %s274
      %p286 = scmp.eq.s32.totalorder %s33, 1
      %p287 = por %p285, %p286
      %p289 = scmp.ne.s32.totalorder %s274, %s288
      %p290 = scmp.eq.s32.totalorder %s33, 0
      %p291 = por %p289, %p290
      %s292 = ssub.s32 %s27, %s34
      %p293 = scmp.eq.s32.totalorder %s292, 0
      %s295 = sadd.s32 %s294, 1
      %s296 = scalar_select %p293, %s294, %s295
      %p299 = pneg %p293
      %p300 = scmp.eq.s32.totalorder %s27, 1
      %p301 = por %p299, %p300
      %p302 = scmp.ne.s32.totalorder %s294, %s297
      %p303 = scmp.eq.s32.totalorder %s27, 0
      %p304 = por %p302, %p303
      %p305 = scmp.ne.s32.totalorder %s294, %s297
      %p306 = scmp.eq.s32.totalorder %s32, 1
      %p307 = por %p305, %p306
      %p308 = scmp.ne.s32.totalorder %s297, %s298
      %p309 = scmp.eq.s32.totalorder %s32, 0
      %p310 = por %p308, %p309
      %p311 = scmp.ne.s32.totalorder %s297, %s298
      %p312 = scmp.eq.s32.totalorder %s33, 1
      %p313 = por %p311, %p312
      %p315 = scmp.ne.s32.totalorder %s298, %s314
      %p316 = scmp.eq.s32.totalorder %s33, 0
      %p317 = por %p315, %p316
      %p318 = scmp.le.s32.totalorder 1, %s27
      %p319 = scmp.lt.s32.totalorder %s27, 3
      %p320 = pnand %p318, %p319
      %p321 = pneg %p320
      // Predicated region
      $region9: #{tpu_custom_call.1} parent=5 // pred_check
        _
      $region10: #{tpu_custom_call.1} parent=5 // pred_check_branch
        %323 = sbr.rel (%p320) target = $region12
      $region11: #{tpu_custom_call.1} parent=5 // pred_region
        %s324 = ssub.s32 %s27, 1
        // Predicated region
        $region13: #{tpu_custom_call.1} parent=11 // pred_check
          %p325 = pneg %p74
        $region14: #{tpu_custom_call.1} parent=11 // pred_check_branch
          %327 = sbr.rel (%p325) target = $region16
        $region15: #{tpu_custom_call.1} parent=11 // pred_region
          %329 = vsyncadd [#allocation6], 0
          %s331 = sshll.u32 %s1, 4
          %s332 = int_to_ptr.hbm [resolvable:$true] %s331
          %s333 = sshll.u32 [#allocation5], 4
          %s334 = int_to_ptr.vmem [resolvable:$true] %s333
          %336 = dma.hbm_to_vmem [thread:$0]  %s332, 16, %s334, [#allocation6]
        $region16: #{tpu_custom_call.1} parent=11 // pred_fallthru
          _
        // Predicated region
        $region17: #{tpu_custom_call.1} parent=11 // pred_check
          %p337 = pneg %p95
        $region18: #{tpu_custom_call.1} parent=11 // pred_check_branch
          %339 = sbr.rel (%p337) target = $region20
        $region19: #{tpu_custom_call.1} parent=11 // pred_region
          _
        $region20: #{tpu_custom_call.1} parent=11 // pred_fallthru
          _
        // Predicated region
        $region21: #{tpu_custom_call.1} parent=11 // pred_check
          %p340 = pneg %p116
        $region22: #{tpu_custom_call.1} parent=11 // pred_check_branch
          %342 = sbr.rel (%p340) target = $region24
        $region23: #{tpu_custom_call.1} parent=11 // pred_region
          _
        $region24: #{tpu_custom_call.1} parent=11 // pred_fallthru
          _
        // Predicated region
        $region25: #{tpu_custom_call.1} parent=11 // pred_check
          %p343 = pneg %p137
        $region26: #{tpu_custom_call.1} parent=11 // pred_check_branch
          %345 = sbr.rel (%p343) target = $region28
        $region27: #{tpu_custom_call.1} parent=11 // pred_region
          %347 = vsyncadd [#allocation6], 0
          %s348 = sshll.u32 %s4, 4
          %s349 = int_to_ptr.hbm [resolvable:$true] %s348
          %s350 = sshll.u32 [#allocation7], 4
          %s351 = int_to_ptr.vmem [resolvable:$true] %s350
          %356 = dma.hbm_to_vmem [thread:$0]  %s349, 512, %s351, [#allocation6], 128, 128, 8
        $region28: #{tpu_custom_call.1} parent=11 // pred_fallthru
          _
        // Predicated region
        $region29: #{tpu_custom_call.1} parent=11 // pred_check
          %p357 = pneg %p158
        $region30: #{tpu_custom_call.1} parent=11 // pred_check_branch
          %359 = sbr.rel (%p357) target = $region32
        $region31: #{tpu_custom_call.1} parent=11 // pred_region
          _
        $region32: #{tpu_custom_call.1} parent=11 // pred_fallthru
          _
        // Predicated region
        $region33: #{tpu_custom_call.1} parent=11 // pred_check
          %p360 = pneg %p179
        $region34: #{tpu_custom_call.1} parent=11 // pred_check_branch
          %362 = sbr.rel (%p360) target = $region36
        $region35: #{tpu_custom_call.1} parent=11 // pred_region
          %364 = vsyncadd [#allocation9], 0
          %s365 = sshll.u32 %s6, 4
          %s366 = int_to_ptr.hbm [resolvable:$true] %s365
          %s367 = sshll.u32 [#allocation8], 4
          %s368 = int_to_ptr.vmem [resolvable:$true] %s367
          %373 = dma.hbm_to_vmem [thread:$0]  %s366, 512, %s368, [#allocation9], 128, 128, 8
        $region36: #{tpu_custom_call.1} parent=11 // pred_fallthru
          _
        // Predicated region
        $region37: #{tpu_custom_call.1} parent=11 // pred_check
          %p374 = pneg %p200
        $region38: #{tpu_custom_call.1} parent=11 // pred_check_branch
          %376 = sbr.rel (%p374) target = $region40
        $region39: #{tpu_custom_call.1} parent=11 // pred_region
          _
        $region40: #{tpu_custom_call.1} parent=11 // pred_fallthru
          _
        // Predicated region
        $region41: #{tpu_custom_call.1} parent=11 // pred_check
          %p377 = pneg %p221
        $region42: #{tpu_custom_call.1} parent=11 // pred_check_branch
          %379 = sbr.rel (%p377) target = $region44
        $region43: #{tpu_custom_call.1} parent=11 // pred_region
          %381 = vsyncadd [#allocation9], 0
          %s382 = sshll.u32 %s8, 4
          %s383 = int_to_ptr.hbm [resolvable:$true] %s382
          %s384 = sshll.u32 [#allocation10], 4
          %s385 = int_to_ptr.vmem [resolvable:$true] %s384
          %390 = dma.hbm_to_vmem [thread:$0]  %s383, 512, %s385, [#allocation9], 128, 128, 8
        $region44: #{tpu_custom_call.1} parent=11 // pred_fallthru
          _
        // Predicated region
        $region45: #{tpu_custom_call.1} parent=11 // pred_check
          %p391 = pneg %p242
        $region46: #{tpu_custom_call.1} parent=11 // pred_check_branch
          %393 = sbr.rel (%p391) target = $region48
        $region47: #{tpu_custom_call.1} parent=11 // pred_region
          _
        $region48: #{tpu_custom_call.1} parent=11 // pred_fallthru
          _
        // Predicated region
        $region49: #{tpu_custom_call.1} parent=11 // pred_check
          %p394 = pneg %p263
        $region50: #{tpu_custom_call.1} parent=11 // pred_check_branch
          %396 = sbr.rel (%p394) target = $region52
        $region51: #{tpu_custom_call.1} parent=11 // pred_region
          %398 = vsyncadd [#allocation12], 0
          %s399 = sshll.u32 %s10, 4
          %s400 = int_to_ptr.hbm [resolvable:$true] %s399
          %s401 = sshll.u32 [#allocation11], 4
          %s402 = int_to_ptr.vmem [resolvable:$true] %s401
          %407 = dma.hbm_to_vmem [thread:$0]  %s400, 512, %s402, [#allocation12], 128, 128, 8
        $region52: #{tpu_custom_call.1} parent=11 // pred_fallthru
          _
        // Predicated region
        $region53: #{tpu_custom_call.1} parent=11 // pred_check
          %p408 = pneg %p284
        $region54: #{tpu_custom_call.1} parent=11 // pred_check_branch
          %410 = sbr.rel (%p408) target = $region56
        $region55: #{tpu_custom_call.1} parent=11 // pred_region
          _
        $region56: #{tpu_custom_call.1} parent=11 // pred_fallthru
          _
      $region12: #{tpu_custom_call.1} parent=5 // pred_fallthru
        _
      %p411 = scmp.lt.s32.totalorder %s27, 2
      // Predicated region
      $region57: #{tpu_custom_call.1} parent=5 // pred_check
        %p412 = pneg %p411
      $region58: #{tpu_custom_call.1} parent=5 // pred_check_branch
        %414 = sbr.rel (%p412) target = $region60
      $region59: #{tpu_custom_call.1} parent=5 // pred_region
        // Predicated region
        $region61: #{tpu_custom_call.1} parent=59 // pred_check
          %p415 = pneg %p47
        $region62: #{tpu_custom_call.1} parent=59 // pred_check_branch
          %417 = sbr.rel (%p415) target = $region64
        $region63: #{tpu_custom_call.1} parent=59 // pred_region
          %s418 = sand.u32 %s37, 1
          %s419 = scalar_lea.sflag [#allocation3], %s418
          %s420 = sand.u32 %s37, 1
          %s421 = smul.addr %s420, 8
          %s422 = scalar_lea.vmem [#allocation2], %s421
          %424 = vsyncadd %s419, 0
          %s425 = smul.addr %s27, 8
          %s426 = scalar_lea.hbm %s0, %s425
          %s428 = sshll.u32 %s426, 4
          %s429 = int_to_ptr.hbm [resolvable:$true] %s428
          %s430 = sshll.u32 %s422, 4
          %s431 = int_to_ptr.vmem [resolvable:$true] %s430
          %433 = dma.hbm_to_vmem [thread:$0]  %s429, 128, %s431, %s419
        $region64: #{tpu_custom_call.1} parent=59 // pred_fallthru
          _
      $region60: #{tpu_custom_call.1} parent=5 // pred_fallthru
        _
      %p434 = scmp.le.s32.totalorder 1, %s27
      %p435 = scmp.lt.s32.totalorder %s27, 3
      %p436 = pnand %p434, %p435
      %p437 = pneg %p436
      // Predicated region
      $region65: #{tpu_custom_call.1} parent=5 // pred_check
        _
      $region66: #{tpu_custom_call.1} parent=5 // pred_check_branch
        %439 = sbr.rel (%p436) target = $region68
      $region67: #{tpu_custom_call.1} parent=5 // pred_region
        %s440 = ssub.s32 %s27, 1
        %s441 = sand.u32 %s40, 1
        %s442 = scalar_lea.sflag [#allocation3], %s441
        %s443 = sand.u32 %s40, 1
        %s444 = smul.addr %s443, 8
        %s445 = scalar_lea.vmem [#allocation2], %s444
        // Predicated region
        $region69: #{tpu_custom_call.1} parent=67 // pred_check
          %p446 = pneg %p53
        $region70: #{tpu_custom_call.1} parent=67 // pred_check_branch
          %448 = sbr.rel (%p446) target = $region72
        $region71: #{tpu_custom_call.1} parent=67 // pred_region
          %450 = dma.done %s442, 128
        $region72: #{tpu_custom_call.1} parent=67 // pred_fallthru
          _
        // Predicated region
        $region73: #{tpu_custom_call.1} parent=67 // pred_check
          %p451 = pneg %p74
        $region74: #{tpu_custom_call.1} parent=67 // pred_check_branch
          %453 = sbr.rel (%p451) target = $region76
        $region75: #{tpu_custom_call.1} parent=67 // pred_region
          %455 = dma.done [#allocation6], 16
        $region76: #{tpu_custom_call.1} parent=67 // pred_fallthru
          _
        // Predicated region
        $region77: #{tpu_custom_call.1} parent=67 // pred_check
          %p456 = pneg %p137
        $region78: #{tpu_custom_call.1} parent=67 // pred_check_branch
          %458 = sbr.rel (%p456) target = $region80
        $region79: #{tpu_custom_call.1} parent=67 // pred_region
          %460 = dma.done [#allocation6], 512
        $region80: #{tpu_custom_call.1} parent=67 // pred_fallthru
          _
        // Predicated region
        $region81: #{tpu_custom_call.1} parent=67 // pred_check
          %p461 = pneg %p179
        $region82: #{tpu_custom_call.1} parent=67 // pred_check_branch
          %463 = sbr.rel (%p461) target = $region84
        $region83: #{tpu_custom_call.1} parent=67 // pred_region
          %465 = dma.done [#allocation9], 512
        $region84: #{tpu_custom_call.1} parent=67 // pred_fallthru
          _
        // Predicated region
        $region85: #{tpu_custom_call.1} parent=67 // pred_check
          %p466 = pneg %p221
        $region86: #{tpu_custom_call.1} parent=67 // pred_check_branch
          %468 = sbr.rel (%p466) target = $region88
        $region87: #{tpu_custom_call.1} parent=67 // pred_region
          %470 = dma.done [#allocation9], 512
        $region88: #{tpu_custom_call.1} parent=67 // pred_fallthru
          _
        // Predicated region
        $region89: #{tpu_custom_call.1} parent=67 // pred_check
          %p471 = pneg %p263
        $region90: #{tpu_custom_call.1} parent=67 // pred_check_branch
          %473 = sbr.rel (%p471) target = $region92
        $region91: #{tpu_custom_call.1} parent=67 // pred_region
          %475 = dma.done [#allocation12], 512
        $region92: #{tpu_custom_call.1} parent=67 // pred_fallthru
          _
        %s476 = sand.u32 %s40, 1
        %s477 = scalar_lea.sflag [#allocation3], %s476
        %s478 = sand.u32 %s40, 1
        %s479 = smul.addr %s478, 8
        %s480 = scalar_lea.vmem [#allocation2], %s479
        %p481 = pneg %p53
        %p482 = pneg %p50
        %p483 = pneg %p74
        %p484 = pneg %p71
        %p485 = pneg %p95
        %p486 = pneg %p92
        %p487 = pneg %p116
        %p488 = pneg %p113
        %p489 = pneg %p137
        %p490 = pneg %p134
        %p491 = pneg %p158
        %p492 = pneg %p155
        %p493 = pneg %p179
        %p494 = pneg %p176
        %p495 = pneg %p200
        %p496 = pneg %p197
        %p497 = pneg %p221
        %p498 = pneg %p218
        %p499 = pneg %p242
        %p500 = pneg %p239
        %p501 = pneg %p263
        %p502 = pneg %p260
        %p503 = pneg %p284
        %p504 = pneg %p281
        %p505 = pneg %p310
        %p506 = pneg %p307
        %s507 = sand.u32 %s297, 1
        %s508 = scalar_lea.sflag [#allocation4], %s507
        %s509 = sand.u32 %s297, 1
        %s510 = smul.addr %s509, 8
        %s511 = scalar_lea.vmem [#allocation13], %s510
        %v512 = vld [vmem:[%s445] sm:$0xff]
        %v513 = vld [vmem:[#allocation5] sm:$0x1]
        %v514 = vld [vmem:[%s2] sm:$0x1]
        %vm515 = vcmask 261120
        %v516 = vsel %vm515, %v512, 0.0
        %517 = vadd.xlane.f32.xlu0 %v516
        %v518 = vpop.xlane.xlu0 %517
        %v519 = vrcp.pop 32.0
        %v520 = vmul.f32 32.0, %v519
        %v521 = vsub.f32 1.0, %v520
        %v522 = vmul.f32 %v519, %v521
        %v523 = vadd.f32 %v519, %v522
        %vm524 = vweird.f32 %v519
        %v525 = vsel %vm524, %v519, %v523
        %v526 = vmul.f32 %v518, %v525
        %v527 = vsub.f32 %v512, %v526
        %v528 = vmul.f32 %v527, %v527
        %v529 = vsel %vm515, %v528, 0.0
        %530 = vadd.xlane.f32.xlu0 %v529
        %v531 = vpop.xlane.xlu0 %530
        %v532 = vmul.f32 %v531, %v525
        %v533 = vadd.f32 %v532, 1e-06
        %v534 = vrsqrt.pop %v533
        %v535 = vmul.f32 %v534, %v533
        %v536 = vmul.f32 %v535, %v534
        %v537 = vmul.f32 0.5, %v536
        %v538 = vsub.f32 1.5, %v537
        %v539 = vmul.f32 %v534, %v538
        %vm540 = vweird.f32 %v533
        %vm541 = vweird.f32 %v534
        %vm542 = vmor %vm540, %vm541
        %v543 = vsel %vm542, %v534, %v539
        %v544 = vmul.f32 %v527, %v543
        %v546 = vperm.slane %v513, 0
        %v548 = vmul.f32 %v544, %v546
        %v550 = vperm.slane %v514, 0
        %v552 = vadd.f32 %v548, %v550
        %v553 = vld [vmem:[#allocation7] sm:$0xff]
        %v554 = vld [vmem:[#allocation7 + $0x8] sm:$0xff]
        %v555 = vld [vmem:[#allocation7 + $0x10] sm:$0xff]
        %v556 = vld [vmem:[#allocation7 + $0x18] sm:$0xff]
        %v557 = vld [vmem:[%s5] sm:$0x1]
        %v559 = vperm.slane %v557, 0
        %v562 = vsel %vm515, %v552, 0
        %564 = vmatpush.msra.mxu0 0.0
        %565 = vmatpush.msra.mxu0 0.0
        %566 = vmatpush.msra.mxu0 0.0
        %567 = vmatpush.msra.mxu0 0.0
        %568 = vmatpush.msra.mxu0 0.0
        %569 = vmatpush.msra.mxu0 0.0
        %570 = vmatpush.msra.mxu0 0.0
        %571 = vmatpush.msra.mxu0 0.0
        %572 = vmatpush.msra.mxu0 0.0
        %573 = vmatpush.msra.mxu0 0.0
        %574 = vmatpush.msra.mxu0 0.0
        %575 = vmatpush.msra.mxu0 0.0
        %576 = vmatpush.msra.mxu0 %v556
        %577 = vmatpush.msra.mxu0 %v555
        %578 = vmatpush.msra.mxu0 %v554
        %579 = vmatpush.msra.mxu0 %v553
        %580 = vmatmul.f32.gmra.mxu0 %v562
        %v581 = vpop.f32.mrf.mxu0
        %v582 = vadd.f32 %v559, %v581
        %583 = vdwg.mxu0
        %v584 = vld [vmem:[#allocation8] sm:$0xff]
        %v585 = vld [vmem:[#allocation8 + $0x8] sm:$0xff]
        %v586 = vld [vmem:[#allocation8 + $0x10] sm:$0xff]
        %v587 = vld [vmem:[#allocation8 + $0x18] sm:$0xff]
        %v588 = vld [vmem:[%s7] sm:$0x1]
        %v590 = vperm.slane %v588, 0
        %592 = vmatpush.msra.mxu0 0.0
        %593 = vmatpush.msra.mxu0 0.0
        %594 = vmatpush.msra.mxu0 0.0
        %595 = vmatpush.msra.mxu0 0.0
        %596 = vmatpush.msra.mxu0 0.0
        %597 = vmatpush.msra.mxu0 0.0
        %598 = vmatpush.msra.mxu0 0.0
        %599 = vmatpush.msra.mxu0 0.0
        %600 = vmatpush.msra.mxu0 0.0
        %601 = vmatpush.msra.mxu0 0.0
        %602 = vmatpush.msra.mxu0 0.0
        %603 = vmatpush.msra.mxu0 0.0
        %604 = vmatpush.msra.mxu0 %v587
        %605 = vmatpush.msra.mxu0 %v586
        %606 = vmatpush.msra.mxu0 %v585
        %607 = vmatpush.msra.mxu0 %v584
        %608 = vmatmul.f32.gmra.mxu0 %v562
        %v609 = vpop.f32.mrf.mxu0
        %v610 = vadd.f32 %v590, %v609
        %611 = vdwg.mxu0
        %v612 = vld [vmem:[#allocation10] sm:$0xff]
        %v613 = vld [vmem:[#allocation10 + $0x8] sm:$0xff]
        %v614 = vld [vmem:[#allocation10 + $0x10] sm:$0xff]
        %v615 = vld [vmem:[#allocation10 + $0x18] sm:$0xff]
        %v616 = vld [vmem:[%s9] sm:$0x1]
        %v618 = vperm.slane %v616, 0
        %620 = vmatpush.msra.mxu0 0.0
        %621 = vmatpush.msra.mxu0 0.0
        %622 = vmatpush.msra.mxu0 0.0
        %623 = vmatpush.msra.mxu0 0.0
        %624 = vmatpush.msra.mxu0 0.0
        %625 = vmatpush.msra.mxu0 0.0
        %626 = vmatpush.msra.mxu0 0.0
        %627 = vmatpush.msra.mxu0 0.0
        %628 = vmatpush.msra.mxu0 0.0
        %629 = vmatpush.msra.mxu0 0.0
        %630 = vmatpush.msra.mxu0 0.0
        %631 = vmatpush.msra.mxu0 0.0
        %632 = vmatpush.msra.mxu0 %v615
        %633 = vmatpush.msra.mxu0 %v614
        %634 = vmatpush.msra.mxu0 %v613
        %635 = vmatpush.msra.mxu0 %v612
        %636 = vmatmul.f32.gmra.mxu0 %v562
        %v637 = vpop.f32.mrf.mxu0
        %v638 = vadd.f32 %v618, %v637
        %639 = vdwg.mxu0
        %v640 = vld [vmem:[#allocation11] sm:$0xff]
        %v641 = vld [vmem:[#allocation11 + $0x8] sm:$0xff]
        %v642 = vld [vmem:[#allocation11 + $0x10] sm:$0xff]
        %v643 = vld [vmem:[#allocation11 + $0x18] sm:$0xff]
        %v644 = vmul.f32 %v582, 0.35355338
        %vm645 = vcmask 64512
        %v647 = vsel %vm645, %v644, 0
        %v650 = vsel %vm645, %v610, 0
        %652 = vmatpush.xpose.msra.mxu0 0.0
        %653 = vmatpush.xpose.msra.mxu0 0.0
        %654 = vmatpush.xpose.msra.mxu0 0.0
        %655 = vmatpush.xpose.msra.mxu0 0.0
        %656 = vmatpush.xpose.msra.mxu0 0.0
        %657 = vmatpush.xpose.msra.mxu0 0.0
        %658 = vmatpush.xpose.msra.mxu0 0.0
        %659 = vmatpush.xpose.msra.mxu0 0.0
        %660 = vmatpush.xpose.msra.mxu0 0.0
        %661 = vmatpush.xpose.msra.mxu0 0.0
        %662 = vmatpush.xpose.msra.mxu0 0.0
        %663 = vmatpush.xpose.msra.mxu0 0.0
        %664 = vmatpush.xpose.msra.mxu0 0.0
        %665 = vmatpush.xpose.msra.mxu0 0.0
        %666 = vmatpush.xpose.msra.mxu0 0.0
        %667 = vmatpush.xpose.msra.mxu0 %v650
        %668 = vmatmul.f32.gmra.mxu0 %v647
        %v669 = vpop.f32.mrf.mxu0
        %v670 = vadd.f32 0.0, %v669
        %671 = vdwg.mxu0
        %v672 = vsel %vm645, %v670, -inf
        %673 = vmax.xlane.f32.xlu0 %v672
        %v674 = vpop.xlane.xlu0 %673
        %v675 = vsub.f32 %v670, %v674
        %v676 = vmul.f32 %v675, 1.442695
        %v677 = vpow.pop %v676
        %v678 = vsel %vm645, %v677, 0.0
        %679 = vadd.xlane.f32.xlu0 %v678
        %v680 = vpop.xlane.xlu0 %679
        %v681 = vrcp.pop %v680
        %v682 = vmul.f32 %v680, %v681
        %v683 = vsub.f32 1.0, %v682
        %v684 = vmul.f32 %v681, %v683
        %v685 = vadd.f32 %v681, %v684
        %vm686 = vweird.f32 %v680
        %vm687 = vweird.f32 %v681
        %vm688 = vmor %vm686, %vm687
        %v689 = vsel %vm688, %v681, %v685
        %v690 = vand.u32 2147483647, %v680
        %vm691 = vcmp.eq.f32.partialorder %v690, 8.507059e+37
        %v692 = vand.u32 %v680, 2147483648
        %v693 = vor.u32 1.1754944e-38, %v692
        %v694 = vsel %vm691, %v693, %v689
        %v695 = vmul.f32 %v677, %v694
        %v697 = vsel %vm645, %v695, 0
        %699 = vmatpush.msra.mxu0 0.0
        %700 = vmatpush.msra.mxu0 0.0
        %701 = vmatpush.msra.mxu0 0.0
        %702 = vmatpush.msra.mxu0 0.0
        %703 = vmatpush.msra.mxu0 0.0
        %704 = vmatpush.msra.mxu0 0.0
        %705 = vmatpush.msra.mxu0 0.0
        %706 = vmatpush.msra.mxu0 0.0
        %707 = vmatpush.msra.mxu0 0.0
        %708 = vmatpush.msra.mxu0 0.0
        %709 = vmatpush.msra.mxu0 0.0
        %710 = vmatpush.msra.mxu0 0.0
        %711 = vmatpush.msra.mxu0 0.0
        %712 = vmatpush.msra.mxu0 0.0
        %713 = vmatpush.msra.mxu0 0.0
        %714 = vmatpush.msra.mxu0 %v638
        %715 = vmatmul.f32.gmra.mxu0 %v697
        %v716 = vpop.f32.mrf.mxu0
        %v717 = vadd.f32 0.0, %v716
        %718 = vdwg.mxu0
        %719 = vrot.lane.b32.xlu0 %v644, 120
        %v720 = vpop.permute.xlu0 %719
        %721 = vrot.lane.b32.xlu0 %v610, 120
        %v722 = vpop.permute.xlu0 %721
        %v723 = vsel %vm645, %v720, 0
        %v725 = vsel %vm645, %v722, 0
        %727 = vmatpush.xpose.msra.mxu0 0.0
        %728 = vmatpush.xpose.msra.mxu0 0.0
        %729 = vmatpush.xpose.msra.mxu0 0.0
        %730 = vmatpush.xpose.msra.mxu0 0.0
        %731 = vmatpush.xpose.msra.mxu0 0.0
        %732 = vmatpush.xpose.msra.mxu0 0.0
        %733 = vmatpush.xpose.msra.mxu0 0.0
        %734 = vmatpush.xpose.msra.mxu0 0.0
        %735 = vmatpush.xpose.msra.mxu0 0.0
        %736 = vmatpush.xpose.msra.mxu0 0.0
        %737 = vmatpush.xpose.msra.mxu0 0.0
        %738 = vmatpush.xpose.msra.mxu0 0.0
        %739 = vmatpush.xpose.msra.mxu0 0.0
        %740 = vmatpush.xpose.msra.mxu0 0.0
        %741 = vmatpush.xpose.msra.mxu0 0.0
        %742 = vmatpush.xpose.msra.mxu0 %v725
        %743 = vmatmul.f32.gmra.mxu0 %v723
        %v744 = vpop.f32.mrf.mxu0
        %v745 = vadd.f32 0.0, %v744
        %746 = vdwg.mxu0
        %v747 = vsel %vm645, %v745, -inf
        %748 = vmax.xlane.f32.xlu0 %v747
        %v749 = vpop.xlane.xlu0 %748
        %v750 = vsub.f32 %v745, %v749
        %v751 = vmul.f32 %v750, 1.442695
        %v752 = vpow.pop %v751
        %v753 = vsel %vm645, %v752, 0.0
        %754 = vadd.xlane.f32.xlu0 %v753
        %v755 = vpop.xlane.xlu0 %754
        %v756 = vrcp.pop %v755
        %v757 = vmul.f32 %v755, %v756
        %v758 = vsub.f32 1.0, %v757
        %v759 = vmul.f32 %v756, %v758
        %v760 = vadd.f32 %v756, %v759
        %vm761 = vweird.f32 %v755
        %vm762 = vweird.f32 %v756
        %vm763 = vmor %vm761, %vm762
        %v764 = vsel %vm763, %v756, %v760
        %v765 = vand.u32 2147483647, %v755
        %vm766 = vcmp.eq.f32.partialorder %v765, 8.507059e+37
        %v767 = vand.u32 %v755, 2147483648
        %v768 = vor.u32 1.1754944e-38, %v767
        %v769 = vsel %vm766, %v768, %v764
        %v770 = vmul.f32 %v752, %v769
        %772 = vrot.lane.b32.xlu0 %v638, 120
        %v773 = vpop.permute.xlu0 %772
        %v776 = vsel %vm645, %v770, 0
        %778 = vmatpush.msra.mxu0 0.0
        %779 = vmatpush.msra.mxu0 0.0
        %780 = vmatpush.msra.mxu0 0.0
        %781 = vmatpush.msra.mxu0 0.0
        %782 = vmatpush.msra.mxu0 0.0
        %783 = vmatpush.msra.mxu0 0.0
        %784 = vmatpush.msra.mxu0 0.0
        %785 = vmatpush.msra.mxu0 0.0
        %786 = vmatpush.msra.mxu0 0.0
        %787 = vmatpush.msra.mxu0 0.0
        %788 = vmatpush.msra.mxu0 0.0
        %789 = vmatpush.msra.mxu0 0.0
        %790 = vmatpush.msra.mxu0 0.0
        %791 = vmatpush.msra.mxu0 0.0
        %792 = vmatpush.msra.mxu0 0.0
        %793 = vmatpush.msra.mxu0 %v773
        %794 = vmatmul.f32.gmra.mxu0 %v776
        %v795 = vpop.f32.mrf.mxu0
        %v796 = vadd.f32 0.0, %v795
        %797 = vdwg.mxu0
        %v799 = vsel %vm645, %v796, 0
        %801 = vmatpush.msra.mxu0 0.0
        %802 = vmatpush.msra.mxu0 0.0
        %803 = vmatpush.msra.mxu0 0.0
        %804 = vmatpush.msra.mxu0 0.0
        %805 = vmatpush.msra.mxu0 0.0
        %806 = vmatpush.msra.mxu0 0.0
        %807 = vmatpush.msra.mxu0 0.0
        %808 = vmatpush.msra.mxu0 0.0
        %809 = vmatpush.msra.mxu0 0.0
        %810 = vmatpush.msra.mxu0 0.0
        %811 = vmatpush.msra.mxu0 0.0
        %812 = vmatpush.msra.mxu0 0.0
        %813 = vmatpush.msra.mxu0 0.0
        %814 = vmatpush.msra.mxu0 0.0
        %815 = vmatpush.msra.mxu0 0.0
        %816 = vmatpush.msra.mxu0 %v641
        %817 = vmatmul.f32.gmra.mxu0 %v799
        %v818 = vpop.f32.mrf.mxu0
        %v819 = vadd.f32 0.0, %v818
        %820 = vdwg.mxu0
        %v822 = vsel %vm645, %v717, 0
        %824 = vmatpush.msra.mxu0 0.0
        %825 = vmatpush.msra.mxu0 0.0
        %826 = vmatpush.msra.mxu0 0.0
        %827 = vmatpush.msra.mxu0 0.0
        %828 = vmatpush.msra.mxu0 0.0
        %829 = vmatpush.msra.mxu0 0.0
        %830 = vmatpush.msra.mxu0 0.0
        %831 = vmatpush.msra.mxu0 0.0
        %832 = vmatpush.msra.mxu0 0.0
        %833 = vmatpush.msra.mxu0 0.0
        %834 = vmatpush.msra.mxu0 0.0
        %835 = vmatpush.msra.mxu0 0.0
        %836 = vmatpush.msra.mxu0 0.0
        %837 = vmatpush.msra.mxu0 0.0
        %838 = vmatpush.msra.mxu0 0.0
        %839 = vmatpush.msra.mxu0 %v640
        %840 = vmatmul.f32.gmra.mxu0 %v822
        %v841 = vpop.f32.mrf.mxu0
        %v842 = vadd.f32 %v819, %v841
        %843 = vdwg.mxu0
        %844 = vrot.lane.b32.xlu0 %v644, 112
        %v845 = vpop.permute.xlu0 %844
        %846 = vrot.lane.b32.xlu0 %v610, 112
        %v847 = vpop.permute.xlu0 %846
        %v848 = vsel %vm645, %v845, 0
        %v850 = vsel %vm645, %v847, 0
        %852 = vmatpush.xpose.msra.mxu0 0.0
        %853 = vmatpush.xpose.msra.mxu0 0.0
        %854 = vmatpush.xpose.msra.mxu0 0.0
        %855 = vmatpush.xpose.msra.mxu0 0.0
        %856 = vmatpush.xpose.msra.mxu0 0.0
        %857 = vmatpush.xpose.msra.mxu0 0.0
        %858 = vmatpush.xpose.msra.mxu0 0.0
        %859 = vmatpush.xpose.msra.mxu0 0.0
        %860 = vmatpush.xpose.msra.mxu0 0.0
        %861 = vmatpush.xpose.msra.mxu0 0.0
        %862 = vmatpush.xpose.msra.mxu0 0.0
        %863 = vmatpush.xpose.msra.mxu0 0.0
        %864 = vmatpush.xpose.msra.mxu0 0.0
        %865 = vmatpush.xpose.msra.mxu0 0.0
        %866 = vmatpush.xpose.msra.mxu0 0.0
        %867 = vmatpush.xpose.msra.mxu0 %v850
        %868 = vmatmul.f32.gmra.mxu0 %v848
        %v869 = vpop.f32.mrf.mxu0
        %v870 = vadd.f32 0.0, %v869
        %871 = vdwg.mxu0
        %v872 = vsel %vm645, %v870, -inf
        %873 = vmax.xlane.f32.xlu0 %v872
        %v874 = vpop.xlane.xlu0 %873
        %v875 = vsub.f32 %v870, %v874
        %v876 = vmul.f32 %v875, 1.442695
        %v877 = vpow.pop %v876
        %v878 = vsel %vm645, %v877, 0.0
        %879 = vadd.xlane.f32.xlu0 %v878
        %v880 = vpop.xlane.xlu0 %879
        %v881 = vrcp.pop %v880
        %v882 = vmul.f32 %v880, %v881
        %v883 = vsub.f32 1.0, %v882
        %v884 = vmul.f32 %v881, %v883
        %v885 = vadd.f32 %v881, %v884
        %vm886 = vweird.f32 %v880
        %vm887 = vweird.f32 %v881
        %vm888 = vmor %vm886, %vm887
        %v889 = vsel %vm888, %v881, %v885
        %v890 = vand.u32 2147483647, %v880
        %vm891 = vcmp.eq.f32.partialorder %v890, 8.507059e+37
        %v892 = vand.u32 %v880, 2147483648
        %v893 = vor.u32 1.1754944e-38, %v892
        %v894 = vsel %vm891, %v893, %v889
        %v895 = vmul.f32 %v877, %v894
        %896 = vrot.lane.b32.xlu0 %v638, 112
        %v897 = vpop.permute.xlu0 %896
        %v900 = vsel %vm645, %v895, 0
        %902 = vmatpush.msra.mxu0 0.0
        %903 = vmatpush.msra.mxu0 0.0
        %904 = vmatpush.msra.mxu0 0.0
        %905 = vmatpush.msra.mxu0 0.0
        %906 = vmatpush.msra.mxu0 0.0
        %907 = vmatpush.msra.mxu0 0.0
        %908 = vmatpush.msra.mxu0 0.0
        %909 = vmatpush.msra.mxu0 0.0
        %910 = vmatpush.msra.mxu0 0.0
        %911 = vmatpush.msra.mxu0 0.0
        %912 = vmatpush.msra.mxu0 0.0
        %913 = vmatpush.msra.mxu0 0.0
        %914 = vmatpush.msra.mxu0 0.0
        %915 = vmatpush.msra.mxu0 0.0
        %916 = vmatpush.msra.mxu0 0.0
        %917 = vmatpush.msra.mxu0 %v897
        %918 = vmatmul.f32.gmra.mxu0 %v900
        %v919 = vpop.f32.mrf.mxu0
        %v920 = vadd.f32 0.0, %v919
        %921 = vdwg.mxu0
        %v923 = vsel %vm645, %v920, 0
        %925 = vmatpush.msra.mxu0 0.0
        %926 = vmatpush.msra.mxu0 0.0
        %927 = vmatpush.msra.mxu0 0.0
        %928 = vmatpush.msra.mxu0 0.0
        %929 = vmatpush.msra.mxu0 0.0
        %930 = vmatpush.msra.mxu0 0.0
        %931 = vmatpush.msra.mxu0 0.0
        %932 = vmatpush.msra.mxu0 0.0
        %933 = vmatpush.msra.mxu0 0.0
        %934 = vmatpush.msra.mxu0 0.0
        %935 = vmatpush.msra.mxu0 0.0
        %936 = vmatpush.msra.mxu0 0.0
        %937 = vmatpush.msra.mxu0 0.0
        %938 = vmatpush.msra.mxu0 0.0
        %939 = vmatpush.msra.mxu0 0.0
        %940 = vmatpush.msra.mxu0 %v642
        %941 = vmatmul.f32.gmra.mxu0 %v923
        %v942 = vpop.f32.mrf.mxu0
        %v943 = vadd.f32 0.0, %v942
        %944 = vdwg.mxu0
        %v945 = vadd.f32 %v842, %v943
        %946 = vrot.lane.b32.xlu0 %v644, 104
        %v947 = vpop.permute.xlu0 %946
        %948 = vrot.lane.b32.xlu0 %v610, 104
        %v949 = vpop.permute.xlu0 %948
        %v950 = vsel %vm645, %v947, 0
        %v952 = vsel %vm645, %v949, 0
        %954 = vmatpush.xpose.msra.mxu0 0.0
        %955 = vmatpush.xpose.msra.mxu0 0.0
        %956 = vmatpush.xpose.msra.mxu0 0.0
        %957 = vmatpush.xpose.msra.mxu0 0.0
        %958 = vmatpush.xpose.msra.mxu0 0.0
        %959 = vmatpush.xpose.msra.mxu0 0.0
        %960 = vmatpush.xpose.msra.mxu0 0.0
        %961 = vmatpush.xpose.msra.mxu0 0.0
        %962 = vmatpush.xpose.msra.mxu0 0.0
        %963 = vmatpush.xpose.msra.mxu0 0.0
        %964 = vmatpush.xpose.msra.mxu0 0.0
        %965 = vmatpush.xpose.msra.mxu0 0.0
        %966 = vmatpush.xpose.msra.mxu0 0.0
        %967 = vmatpush.xpose.msra.mxu0 0.0
        %968 = vmatpush.xpose.msra.mxu0 0.0
        %969 = vmatpush.xpose.msra.mxu0 %v952
        %970 = vmatmul.f32.gmra.mxu0 %v950
        %v971 = vpop.f32.mrf.mxu0
        %v972 = vadd.f32 0.0, %v971
        %973 = vdwg.mxu0
        %v974 = vsel %vm645, %v972, -inf
        %975 = vmax.xlane.f32.xlu0 %v974
        %v976 = vpop.xlane.xlu0 %975
        %v977 = vsub.f32 %v972, %v976
        %v978 = vmul.f32 %v977, 1.442695
        %v979 = vpow.pop %v978
        %v980 = vsel %vm645, %v979, 0.0
        %981 = vadd.xlane.f32.xlu0 %v980
        %v982 = vpop.xlane.xlu0 %981
        %v983 = vrcp.pop %v982
        %v984 = vmul.f32 %v982, %v983
        %v985 = vsub.f32 1.0, %v984
        %v986 = vmul.f32 %v983, %v985
        %v987 = vadd.f32 %v983, %v986
        %vm988 = vweird.f32 %v982
        %vm989 = vweird.f32 %v983
        %vm990 = vmor %vm988, %vm989
        %v991 = vsel %vm990, %v983, %v987
        %v992 = vand.u32 2147483647, %v982
        %vm993 = vcmp.eq.f32.partialorder %v992, 8.507059e+37
        %v994 = vand.u32 %v982, 2147483648
        %v995 = vor.u32 1.1754944e-38, %v994
        %v996 = vsel %vm993, %v995, %v991
        %v997 = vmul.f32 %v979, %v996
        %998 = vrot.lane.b32.xlu0 %v638, 104
        %v999 = vpop.permute.xlu0 %998
        %v1002 = vsel %vm645, %v997, 0
        %1004 = vmatpush.msra.mxu0 0.0
        %1005 = vmatpush.msra.mxu0 0.0
        %1006 = vmatpush.msra.mxu0 0.0
        %1007 = vmatpush.msra.mxu0 0.0
        %1008 = vmatpush.msra.mxu0 0.0
        %1009 = vmatpush.msra.mxu0 0.0
        %1010 = vmatpush.msra.mxu0 0.0
        %1011 = vmatpush.msra.mxu0 0.0
        %1012 = vmatpush.msra.mxu0 0.0
        %1013 = vmatpush.msra.mxu0 0.0
        %1014 = vmatpush.msra.mxu0 0.0
        %1015 = vmatpush.msra.mxu0 0.0
        %1016 = vmatpush.msra.mxu0 0.0
        %1017 = vmatpush.msra.mxu0 0.0
        %1018 = vmatpush.msra.mxu0 0.0
        %1019 = vmatpush.msra.mxu0 %v999
        %1020 = vmatmul.f32.gmra.mxu0 %v1002
        %v1021 = vpop.f32.mrf.mxu0
        %v1022 = vadd.f32 0.0, %v1021
        %1023 = vdwg.mxu0
        %v1025 = vsel %vm645, %v1022, 0
        %1027 = vmatpush.msra.mxu0 0.0
        %1028 = vmatpush.msra.mxu0 0.0
        %1029 = vmatpush.msra.mxu0 0.0
        %1030 = vmatpush.msra.mxu0 0.0
        %1031 = vmatpush.msra.mxu0 0.0
        %1032 = vmatpush.msra.mxu0 0.0
        %1033 = vmatpush.msra.mxu0 0.0
        %1034 = vmatpush.msra.mxu0 0.0
        %1035 = vmatpush.msra.mxu0 0.0
        %1036 = vmatpush.msra.mxu0 0.0
        %1037 = vmatpush.msra.mxu0 0.0
        %1038 = vmatpush.msra.mxu0 0.0
        %1039 = vmatpush.msra.mxu0 0.0
        %1040 = vmatpush.msra.mxu0 0.0
        %1041 = vmatpush.msra.mxu0 0.0
        %1042 = vmatpush.msra.mxu0 %v643
        %1043 = vmatmul.f32.gmra.mxu0 %v1025
        %v1044 = vpop.f32.mrf.mxu0
        %v1045 = vadd.f32 0.0, %v1044
        %1046 = vdwg.mxu0
        %v1047 = vadd.f32 %v945, %v1045
        %v1048 = vld [vmem:[%s11] sm:$0x1]
        %v1050 = vperm.slane %v1048, 0
        %v1052 = vadd.f32 %v1047, %v1050
        %v1053 = vld [vmem:[%s3] sm:$0x1]
        %v1055 = vperm.slane %v1053, 0
        %v1057 = vmul.f32 %v1055, %v1052
        %v1058 = vadd.f32 %v512, %v1057
        %1059 = vst.msk [vmem:[%s511] sm:$0xff] %vm515, %v1058
        %s1060 = sand.u32 %s297, 1
        %s1061 = scalar_lea.sflag [#allocation4], %s1060
        %s1062 = sand.u32 %s297, 1
        %s1063 = smul.addr %s1062, 8
        %s1064 = scalar_lea.vmem [#allocation13], %s1063
        // Predicated region
        $region93: #{tpu_custom_call.1} parent=67 // pred_check
          %p1065 = pneg %p307
        $region94: #{tpu_custom_call.1} parent=67 // pred_check_branch
          %1067 = sbr.rel (%p1065) target = $region96
        $region95: #{tpu_custom_call.1} parent=67 // pred_region
          %1069 = vsyncadd %s1061, 0
          %s1070 = smul.addr %s32, 8
          %s1071 = scalar_lea.hbm %s12, %s1070
          %s1073 = sshll.u32 %s1064, 4
          %s1074 = int_to_ptr.vmem [resolvable:$true] %s1073
          %s1075 = sshll.u32 %s1071, 4
          %s1076 = int_to_ptr.hbm [resolvable:$true] %s1075
          %1078 = dma.vmem_to_hbm [thread:$0]  %s1074, 128, %s1076, %s1061
        $region96: #{tpu_custom_call.1} parent=67 // pred_fallthru
          _
      $region68: #{tpu_custom_call.1} parent=5 // pred_fallthru
        _
      %p1079 = scmp.le.s32.totalorder 2, %s27
      // Predicated region
      $region97: #{tpu_custom_call.1} parent=5 // pred_check
        %p1080 = pneg %p1079
      $region98: #{tpu_custom_call.1} parent=5 // pred_check_branch
        %1082 = sbr.rel (%p1080) target = $region100
      $region99: #{tpu_custom_call.1} parent=5 // pred_region
        %s1083 = ssub.s32 %s27, 2
        // Predicated region
        $region101: #{tpu_custom_call.1} parent=99 // pred_check
          %p1084 = pneg %p313
        $region102: #{tpu_custom_call.1} parent=99 // pred_check_branch
          %1086 = sbr.rel (%p1084) target = $region104
        $region103: #{tpu_custom_call.1} parent=99 // pred_region
          %s1087 = sand.u32 %s298, 1
          %s1088 = scalar_lea.sflag [#allocation4], %s1087
          %s1089 = sand.u32 %s298, 1
          %s1090 = smul.addr %s1089, 8
          %s1091 = scalar_lea.vmem [#allocation13], %s1090
          %1093 = dma.done %s1088, 128
        $region104: #{tpu_custom_call.1} parent=99 // pred_fallthru
          _
      $region100: #{tpu_custom_call.1} parent=5 // pred_fallthru
        _
    $region6: #{tpu_custom_call.1} parent=1 // loop_footer
      %s31 = sadd.s32 1, %s27
    $region7: #{tpu_custom_call.1} parent=1 // loop_footer_branch
      %26 = sbr.rel target = $region3
    $region8: #{tpu_custom_call.1} parent=1 // loop_exit
      _
    %1094 = vsyncpa [#allocation3], 1
    %s1095 = scalar_lea.sflag [#allocation3], 1
    %1096 = vsyncpa %s1095, 1
    %1097 = vsyncpa [#allocation6], 1
    %1098 = vsyncpa [#allocation9], 1
    %1099 = vsyncpa [#allocation12], 1
    %1100 = vsyncpa [#allocation4], 1
    %s1101 = scalar_lea.sflag [#allocation4], 1
    %1102 = vsyncpa %s1101, 1

</llo_original>
